<compile_context>
chip_gen: v5e
topology: v5e:2x2
jax: 0.10.0
libtpu: 0.0.40
codegen_flags: <defaults>
</compile_context>

<pallas_src>
import math
from functools import partial

import numpy as np
import jax
import jax.numpy as jnp
from jax.experimental import pallas as pl
from jax.experimental.pallas import tpu as pltpu

# ----------------------------------------------------------------------------
# Tiled matmul (+bias, optional fused residual / SiLU): bf16 MXU, f32 acc
# ----------------------------------------------------------------------------


def _round_up(x, m):
    return ((x + m - 1) // m) * m


def _pick_tile(dim, prefs, align):
    """Pick a tile size for `dim`; returns (tile, padded_dim)."""
    for t in prefs:
        if dim % t == 0:
            return t, dim
    if dim <= prefs[-1]:
        t = _round_up(dim, align)
        return t, t
    t = prefs[-1]
    return t, _round_up(dim, t)


def _silu(r):
    # exp on EUP, approx reciprocal on EUP -> keeps the epilogue off the VALU.
    return r * pl.reciprocal(1.0 + jnp.exp(-r), approx=True)


def _matmul_kernel(a_ref, b_ref, bias_ref, *rest, activation, has_res):
    if has_res:
        res_ref, o_ref, acc_ref = rest
    else:
        o_ref, acc_ref = rest

    @pl.when(pl.program_id(2) == 0)
    def _():
        acc_ref[...] = jnp.zeros_like(acc_ref)

    acc_ref[...] += jnp.dot(a_ref[...], b_ref[...],
                            preferred_element_type=jnp.float32)

    @pl.when(pl.program_id(2) == pl.num_programs(2) - 1)
    def _():
        r = acc_ref[...] + bias_ref[...]
        if has_res:
            r = r + res_ref[...].astype(jnp.float32)
        if activation == "silu":
            r = _silu(r)
        o_ref[...] = r.astype(o_ref.dtype)


def pallas_matmul_bias(a, b, bias, residual=None, activation=None,
                       out_dtype=jnp.float32):
    """(M,K) @ (K,N) + bias(N,) [+ residual(M,N)] [-> SiLU]."""
    M, K = a.shape
    N = b.shape[1]
    # bf16 lhs: align M tile to 16 (sublane pack); prefer smaller N tile when
    # M is small so the parallel (i,j) grid still has >=2 steps (v7x megacore).
    tm, Mp = _pick_tile(M, (256, 128), 16)
    n_prefs = (256, 128) if Mp >= 256 else (128, 256)
    tn, Np = _pick_tile(N, n_prefs, 128)
    tk, Kp = _pick_tile(K, (512, 384, 256, 128), 128)

    a = a.astype(jnp.bfloat16)
    b = b.astype(jnp.bfloat16)
    bias = bias.astype(jnp.float32).reshape(1, N)
    if (Mp, Kp) != (M, K):
        a = jnp.pad(a, ((0, Mp - M), (0, Kp - K)))
    if (Kp, Np) != (K, N):
        b = jnp.pad(b, ((0, Kp - K), (0, Np - N)))
    if Np != N:
        bias = jnp.pad(bias, ((0, 0), (0, Np - N)))

    in_specs = [
        pl.BlockSpec((tm, tk), lambda i, j, k: (i, k)),
        pl.BlockSpec((tk, tn), lambda i, j, k: (k, j)),
        pl.BlockSpec((1, tn), lambda i, j, k: (0, j)),
    ]
    args = [a, b, bias]
    has_res = residual is not None
    if has_res:
        res = residual.astype(jnp.bfloat16)
        if (Mp, Np) != (M, N):
            res = jnp.pad(res, ((0, Mp - M), (0, Np - N)))
        in_specs.append(pl.BlockSpec((tm, tn), lambda i, j, k: (i, j)))
        args.append(res)

    out = pl.pallas_call(
        partial(_matmul_kernel, activation=activation, has_res=has_res),
        out_shape=jax.ShapeDtypeStruct((Mp, Np), out_dtype),
        grid=(Mp // tm, Np // tn, Kp // tk),
        in_specs=in_specs,
        out_specs=pl.BlockSpec((tm, tn), lambda i, j, k: (i, j)),
        scratch_shapes=[pltpu.VMEM((tm, tn), jnp.float32)],
        compiler_params=pltpu.CompilerParams(
            dimension_semantics=("parallel", "parallel", "arbitrary"),
            vmem_limit_bytes=32 * 1024 * 1024,
        ),
    )(*args)
    if (Mp, Np) != (M, N):
        out = out[:M, :N]
    return out


# ----------------------------------------------------------------------------
# Fused 3x3 stride-1 conv: whole padded NHWC activation in VMEM, in-kernel
# 9-tap accumulation (no HBM im2col buffer), fused bias + optional residual.
# ----------------------------------------------------------------------------


def _conv3x3_kernel(x_ref, w_ref, b_ref, *rest, B, Ho, Wo, Cin, has_res):
    if has_res:
        res_ref, o_ref, acc_ref = rest
    else:
        o_ref, acc_ref = rest

    acc_ref[...] = jnp.zeros_like(acc_ref)
    for t in range(9):
        di, dj = divmod(t, 3)
        w_t = w_ref[t * Cin:(t + 1) * Cin, :]                  # (Cin, tn)
        win = x_ref[:, di:di + Ho, dj:dj + Wo, :]              # (B,Ho,Wo,Cin)
        lhs = win.reshape(B * Ho * Wo, Cin)                    # Wo % 8 == 0
        acc_ref[...] += jnp.dot(lhs, w_t,
                                preferred_element_type=jnp.float32)
    r = acc_ref[...] + b_ref[...]
    if has_res:
        r = r + res_ref[...].astype(jnp.float32)
    o_ref[...] = r.astype(o_ref.dtype)


def pallas_conv3x3(xp, wmat, bias, residual, out_dtype):
    """xp: (B,Hp,Wp,Cin) padded bf16; wmat: (9*Cin,Cout) bf16; bias: (1,Cout)."""
    B, Hp, Wp, Cin = xp.shape
    Ho, Wo = Hp - 2, Wp - 2
    Cout = wmat.shape[1]
    Mb = B * Ho * Wo
    tn = 128
    in_specs = [
        pl.BlockSpec((B, Hp, Wp, Cin), lambda j: (0, 0, 0, 0)),
        pl.BlockSpec((9 * Cin, tn), lambda j: (0, j)),
        pl.BlockSpec((1, tn), lambda j: (0, j)),
    ]
    args = [xp, wmat, bias]
    has_res = residual is not None
    if has_res:
        in_specs.append(pl.BlockSpec((Mb, tn), lambda j: (0, j)))
        args.append(residual.astype(jnp.bfloat16))
    return pl.pallas_call(
        partial(_conv3x3_kernel, B=B, Ho=Ho, Wo=Wo, Cin=Cin, has_res=has_res),
        out_shape=jax.ShapeDtypeStruct((Mb, Cout), out_dtype),
        grid=(Cout // tn,),
        in_specs=in_specs,
        out_specs=pl.BlockSpec((Mb, tn), lambda j: (0, j)),
        scratch_shapes=[pltpu.VMEM((Mb, tn), jnp.float32)],
        compiler_params=pltpu.CompilerParams(
            dimension_semantics=("parallel",),
            vmem_limit_bytes=32 * 1024 * 1024,
        ),
    )(*args)


# ----------------------------------------------------------------------------
# Fused GroupNorm (32 groups, eps=1e-5) + affine [+ scale/shift] [+ SiLU]
# ----------------------------------------------------------------------------


def _gn_kernel(x_ref, cmat_ref, gspread_ref, gamma_ref, beta_ref, *rest,
               inv_n, eps, silu, scale_shift):
    if scale_shift:
        scale_ref, shift_ref, o_ref = rest
    else:
        (o_ref,) = rest
    x = x_ref[...].astype(jnp.float32)                 # (1, HW, C)
    s1 = jnp.sum(x, axis=1)                            # (1, C) f32 stats
    s2 = jnp.sum(x * x, axis=1)                        # (1, C)
    s = jnp.concatenate([s1, s2], axis=0)              # (2, C)
    g = jnp.dot(s, cmat_ref[...],
                preferred_element_type=jnp.float32)    # (2, G) group sums
    spread = jnp.dot(g, gspread_ref[...],
                     preferred_element_type=jnp.float32) * inv_n   # (2, C)
    mean = spread[0:1, :]
    ex2 = spread[1:2, :]
    rstd = jax.lax.rsqrt(ex2 - mean * mean + eps)      # (1, C)
    y = (x - mean[:, None, :]) * rstd[:, None, :]
    y = y * gamma_ref[...][:, None, :] + beta_ref[...][:, None, :]
    if scale_shift:
        y = y * (1.0 + scale_ref[...].astype(jnp.float32)) \
            + shift_ref[...].astype(jnp.float32)
    if silu:
        y = _silu(y)
    o_ref[...] = y.astype(o_ref.dtype)


def pallas_group_norm(x, gamma, beta, *, silu=False, scale=None, shift=None,
                      groups=32, out_dtype=jnp.float32):
    """x: (B, HW, C) channels-last.  scale/shift: optional (B, C)."""
    B, HW, C = x.shape
    cg = C // groups
    gidx = np.arange(C) // cg
    cmat = jnp.asarray((gidx[:, None] == np.arange(groups)[None, :]
                        ).astype(np.float32))           # (C, G) reduce
    gspread = jnp.asarray((np.arange(groups)[:, None] == gidx[None, :]
                           ).astype(np.float32))        # (G, C) spread
    inv_n = 1.0 / float(HW * cg)

    scale_shift = scale is not None
    args = [x, cmat, gspread,
            gamma.reshape(1, C).astype(jnp.float32),
            beta.reshape(1, C).astype(jnp.float32)]
    in_specs = [
        pl.BlockSpec((1, HW, C), lambda i: (i, 0, 0)),
        pl.BlockSpec((C, groups), lambda i: (0, 0)),
        pl.BlockSpec((groups, C), lambda i: (0, 0)),
        pl.BlockSpec((1, C), lambda i: (0, 0)),
        pl.BlockSpec((1, C), lambda i: (0, 0)),
    ]
    if scale_shift:
        args += [scale.reshape(B, 1, C), shift.reshape(B, 1, C)]
        in_specs += [pl.BlockSpec((1, 1, C), lambda i: (i, 0, 0)),
                     pl.BlockSpec((1, 1, C), lambda i: (i, 0, 0))]

    return pl.pallas_call(
        partial(_gn_kernel, inv_n=inv_n, eps=1e-5, silu=silu,
                scale_shift=scale_shift),
        out_shape=jax.ShapeDtypeStruct((B, HW, C), out_dtype),
        grid=(B,),
        in_specs=in_specs,
        out_specs=pl.BlockSpec((1, HW, C), lambda i: (i, 0, 0)),
        compiler_params=pltpu.CompilerParams(
            dimension_semantics=("parallel",)),
    )(*args)


# ----------------------------------------------------------------------------
# Multi-head QKV attention: lane-aligned [Q|K|V] layout, per-head MXU dots
# ----------------------------------------------------------------------------


def _attn_kernel(qkv_ref, o_ref, *, heads, ch):
    x = qkv_ref[0]                                     # (T, 3C) bf16
    C = heads * ch
    q = x[:, :C] * (1.0 / math.sqrt(ch))               # scale folded into q
    k = x[:, C:2 * C]
    v = x[:, 2 * C:]
    for h in range(heads):
        lo, hi = h * ch, (h + 1) * ch
        w = jax.lax.dot_general(q[:, lo:hi], k[:, lo:hi],
                                (((1,), (1,)), ((), ())),
                                preferred_element_type=jnp.float32)   # (T, T)
        w = w - jnp.max(w, axis=-1, keepdims=True)
        e = jnp.exp(w)
        p = e * pl.reciprocal(jnp.sum(e, axis=-1, keepdims=True), approx=True)
        out_h = jnp.dot(p.astype(jnp.bfloat16), v[:, lo:hi],
                        preferred_element_type=jnp.float32)           # (T, ch)
        o_ref[0, :, lo:hi] = out_h.astype(o_ref.dtype)


def pallas_qkv_attention(qkv, heads, out_dtype=jnp.bfloat16):
    """qkv: (B, T, 3*C), columns ordered [Q_allheads | K_allheads | V_allheads]."""
    B, T, C3 = qkv.shape
    C = C3 // 3
    ch = C // heads
    return pl.pallas_call(
        partial(_attn_kernel, heads=heads, ch=ch),
        out_shape=jax.ShapeDtypeStruct((B, T, C), out_dtype),
        grid=(B,),
        in_specs=[pl.BlockSpec((1, T, C3), lambda i: (i, 0, 0))],
        out_specs=pl.BlockSpec((1, T, C), lambda i: (i, 0, 0)),
        compiler_params=pltpu.CompilerParams(
            dimension_semantics=("parallel",)),
    )(qkv.astype(jnp.bfloat16))


# ----------------------------------------------------------------------------
# Conv wrapper (NHWC) and layer wrappers
# ----------------------------------------------------------------------------


@partial(jax.jit, static_argnames=("stride", "pad", "out_dtype"))
def conv2d(x, p, *, stride, pad, residual=None, out_dtype=jnp.bfloat16):
    """x: (B, H, W, Cin) NHWC; p['w']: (Cout, Cin, k, k) torch layout."""
    B, H, W, Cin = x.shape
    Cout, _, k, _ = p["w"].shape
    xb = x.astype(jnp.bfloat16)
    Ho = (H + 2 * pad - k) // stride + 1
    Wo = (W + 2 * pad - k) // stride + 1
    wmat = jnp.transpose(p["w"], (2, 3, 1, 0)).reshape(
        k * k * Cin, Cout).astype(jnp.bfloat16)
    res2d = None if residual is None else residual.reshape(B * Ho * Wo, Cout)

    # Fused tap-loop conv (no HBM im2col) for 3x3/stride-1 with aligned dims.
    if (k == 3 and stride == 1 and pad == 1 and Wo % 8 == 0
            and Cin % 128 == 0 and Cout % 128 == 0):
        xp = jnp.pad(xb, ((0, 0), (1, 1), (1, 1), (0, 0)))
        y = pallas_conv3x3(xp, wmat,
                           p["b"].astype(jnp.float32).reshape(1, Cout),
                           res2d, out_dtype)
        return y.reshape(B, Ho, Wo, Cout)

    # Fallback: im2col matmul (1x1 convs, strided downsamples, Cin=3, tiny maps)
    if pad:
        xb = jnp.pad(xb, ((0, 0), (pad, pad), (pad, pad), (0, 0)))
    if k == 1 and stride == 1:
        cols = xb.reshape(B * Ho * Wo, Cin)
    else:
        patches = [
            xb[:, i:i + stride * (Ho - 1) + 1:stride,
               j:j + stride * (Wo - 1) + 1:stride, :]
            for i in range(k) for j in range(k)
        ]
        cols = jnp.concatenate(patches, axis=-1).reshape(B * Ho * Wo,
                                                         k * k * Cin)
    y = pallas_matmul_bias(cols, wmat, p["b"], residual=res2d,
                           out_dtype=out_dtype)
    return y.reshape(B, Ho, Wo, Cout)


@jax.jit
def resblock_forward(x, emb_silu, p):
    B, H, W, Cin = x.shape
    h = pallas_group_norm(x.reshape(B, H * W, Cin),
                          p["in_norm"]["g"], p["in_norm"]["b"],
                          silu=True, out_dtype=jnp.bfloat16)
    h = conv2d(h.reshape(B, H, W, Cin), p["in_conv"], stride=1, pad=1)
    Cout = h.shape[-1]
    emb_out = pallas_matmul_bias(emb_silu, p["emb_lin"]["w"].T,
                                 p["emb_lin"]["b"],
                                 out_dtype=jnp.bfloat16)       # (B, 2*Cout)
    scale, shift = emb_out[:, :Cout], emb_out[:, Cout:]
    # use_scale_shift_norm=True: GN -> *(1+scale)+shift -> SiLU, all fused.
    h = pallas_group_norm(h.reshape(B, H * W, Cout),
                          p["out_norm"]["g"], p["out_norm"]["b"],
                          silu=True, scale=scale, shift=shift,
                          out_dtype=jnp.bfloat16)
    skip = (conv2d(x, p["skip"], stride=1, pad=0) if "skip" in p
            else x.astype(jnp.bfloat16))
    # dropout p=0 -> identity; residual add fused into out_conv epilogue.
    return conv2d(h.reshape(B, H, W, Cout), p["out_conv"], stride=1, pad=1,
                  residual=skip)


@jax.jit
def attention_forward(x, p):
    B, H, W, C = x.shape
    T = H * W
    ch = C // NUM_HEADS
    xf = x.reshape(B, T, C)
    h = pallas_group_norm(xf, p["norm"]["g"], p["norm"]["b"],
                          out_dtype=jnp.bfloat16)
    # Permute qkv out-channels from per-head-interleaved [q_h|k_h|v_h] to
    # lane-aligned [Q_allheads | K_allheads | V_allheads] blocks.
    idx = np.arange(3 * C)
    part, rem = idx // C, idx % C
    hh, cc = rem // ch, rem % ch
    orig = hh * 3 * ch + part * ch + cc
    wq = jnp.take(p["qkv"]["w"], orig, axis=0)
    bq = jnp.take(p["qkv"]["b"], orig, axis=0)
    qkv = pallas_matmul_bias(h.reshape(B * T, C), wq.T, bq,
                             out_dtype=jnp.bfloat16).reshape(B, T, 3 * C)
    a = pallas_qkv_attention(qkv, NUM_HEADS)                   # (B, T, C)
    out = pallas_matmul_bias(a.reshape(B * T, C), p["proj"]["w"].T,
                             p["proj"]["b"],
                             residual=xf.reshape(B * T, C),
                             out_dtype=jnp.bfloat16)
    return out.reshape(B, H, W, C)


@jax.jit
def upsample_forward(x, p):
    # TODO(synk): the nearest-x2 could be folded into the conv's index math;
    # the intermediate here is tiny (<=256KB) so it is kept explicit.
    x = jnp.repeat(jnp.repeat(x, 2, axis=1), 2, axis=2)        # nearest x2
    return conv2d(x, p, stride=1, pad=1)


@jax.jit
def out_head(x, p_norm, p_conv):
    B, H, W, C = x.shape
    h = pallas_group_norm(x.reshape(B, H * W, C), p_norm["g"], p_norm["b"],
                          silu=True, out_dtype=jnp.bfloat16)
    return conv2d(h.reshape(B, H, W, C), p_conv, stride=1, pad=1,
                  out_dtype=jnp.float32)


# ----------------------------------------------------------------------------
# UNet parameter construction (mirrors UNetModel.__init__)
# ----------------------------------------------------------------------------

MODEL_CH = 128
EMB_DIM = 4 * MODEL_CH
CH_MULT = (1, 2, 2, 2)
NUM_RES = 3
ATTN_DS = (2, 4)
NUM_HEADS = 4


def build_unet_params(key):
    keys = iter(jax.random.split(key, 1024))

    def nk():
        return next(keys)

    def conv_p(cin, cout, k):
        return {"w": 0.02 * jax.random.normal(nk(), (cout, cin, k, k), jnp.float32),
                "b": jnp.zeros((cout,), jnp.float32)}

    def lin_p(cin, cout):
        return {"w": 0.02 * jax.random.normal(nk(), (cout, cin), jnp.float32),
                "b": jnp.zeros((cout,), jnp.float32)}

    def gn_p(c):
        return {"g": jnp.ones((c,), jnp.float32), "b": jnp.zeros((c,), jnp.float32)}

    def res_p(cin, cout):
        p = {"in_norm": gn_p(cin), "in_conv": conv_p(cin, cout, 3),
             "emb_lin": lin_p(EMB_DIM, 2 * cout),        # use_scale_shift_norm=True
             "out_norm": gn_p(cout), "out_conv": conv_p(cout, cout, 3)}
        if cin != cout:
            p["skip"] = conv_p(cin, cout, 1)              # 1x1 skip projection
        return p

    def attn_p(c):
        return {"norm": gn_p(c), "qkv": lin_p(c, 3 * c), "proj": lin_p(c, c)}

    params = {"time_embed": [lin_p(MODEL_CH, EMB_DIM), lin_p(EMB_DIM, EMB_DIM)]}

    input_blocks = [[("conv", conv_p(3, MODEL_CH, 3))]]
    input_chans = [MODEL_CH]
    ch, ds = MODEL_CH, 1
    for level, mult in enumerate(CH_MULT):
        for _ in range(NUM_RES):
            layers = [("res", res_p(ch, mult * MODEL_CH))]
            ch = mult * MODEL_CH
            if ds in ATTN_DS:
                layers.append(("attn", attn_p(ch)))
            input_blocks.append(layers)
            input_chans.append(ch)
        if level != len(CH_MULT) - 1:
            input_blocks.append([("down", conv_p(ch, ch, 3))])
            input_chans.append(ch)
            ds *= 2
    params["input_blocks"] = input_blocks

    params["middle"] = [("res", res_p(ch, ch)), ("attn", attn_p(ch)),
                        ("res", res_p(ch, ch))]

    output_blocks = []
    for level, mult in list(enumerate(CH_MULT))[::-1]:
        for i in range(NUM_RES + 1):
            ich = input_chans.pop()
            layers = [("res", res_p(ch + ich, MODEL_CH * mult))]
            ch = MODEL_CH * mult
            if ds in ATTN_DS:
                layers.append(("attn", attn_p(ch)))
            if level and i == NUM_RES:
                layers.append(("up", conv_p(ch, ch, 3)))
                ds //= 2
            output_blocks.append(layers)
    params["output_blocks"] = output_blocks

    params["out_norm"] = gn_p(ch)
    params["out_conv"] = conv_p(MODEL_CH, 3, 3)
    return params


# ----------------------------------------------------------------------------
# UNet forward (mirrors UNetModel.forward)
# ----------------------------------------------------------------------------


def timestep_embedding(t, dim, max_period=10000.0):
    half = dim // 2
    freqs = jnp.exp(
        -math.log(max_period) * jnp.arange(half, dtype=jnp.float32) / half)
    args = t.astype(jnp.float32)[:, None] * freqs[None]
    return jnp.concatenate([jnp.cos(args), jnp.sin(args)], axis=-1)


@jax.jit
def time_embed_forward(p_te, t):
    e = timestep_embedding(t, MODEL_CH)
    e = pallas_matmul_bias(e, p_te[0]["w"].T, p_te[0]["b"],
                           activation="silu", out_dtype=jnp.bfloat16)
    # The trailing SiLU here is the one every ResBlock's emb_layers applies to
    # `emb`; `emb` is only ever consumed as SiLU(emb), so fusing it is exact.
    e = pallas_matmul_bias(e, p_te[1]["w"].T, p_te[1]["b"],
                           activation="silu", out_dtype=jnp.bfloat16)
    return e


def apply_block(layers, h, emb_silu):
    for tag, p in layers:
        if tag == "conv":
            h = conv2d(h, p, stride=1, pad=1)
        elif tag == "res":
            h = resblock_forward(h, emb_silu, p)
        elif tag == "attn":
            h = attention_forward(h, p)
        elif tag == "down":
            h = conv2d(h, p, stride=2, pad=1)
        elif tag == "up":
            h = upsample_forward(h, p)
    return h


def unet_forward(params, x, t):
    x = jnp.transpose(x, (0, 2, 3, 1))                        # NCHW -> NHWC once
    emb_silu = time_embed_forward(params["time_embed"], t)

    hs = []
    h = x
    for block in params["input_blocks"]:
        h = apply_block(block, h, emb_silu)
        hs.append(h)
    h = apply_block(params["middle"], h, emb_silu)
    for block in params["output_blocks"]:
        h = jnp.concatenate([h, hs.pop()], axis=-1)           # channel concat
        h = apply_block(block, h, emb_silu)

    h = out_head(h, params["out_norm"], params["out_conv"])
    return jnp.transpose(h, (0, 3, 1, 2))                     # NHWC -> NCHW


def my_module_forward(params, t, x, condition=None):
    # MyModule.forward(t, x, condition) -> unet(x, t, condition); num_classes=None
    return unet_forward(params, x, t)


# ----------------------------------------------------------------------------


if __name__ == "__main__":
    kx, kt = jax.random.split(jax.random.PRNGKey(0))
    B, H, W = 2, 16, 16
    x = jax.random.normal(kx, (B, 3, H, W), jnp.float32)
    t = jax.random.uniform(kt, (B,), jnp.float32, 0.0, 1000.0)

    params = build_unet_params(jax.random.PRNGKey(1))

    out = my_module_forward(params, t, x)
    out = jax.block_until_ready(out)

    assert out.shape == (B, 3, H, W), out.shape
    assert bool(jnp.all(jnp.isfinite(out)))
    print("KERNEL_OK")
</pallas_src>

<mosaic_0001>
module attributes {stable_mosaic.version = 11 : i64} {
  func.func @_matmul_kernel(%arg0: i32, %arg1: i32, %arg2: i32, %arg3: memref<16x128xbf16, #tpu.memory_space<vmem>>, %arg4: memref<128x128xbf16, #tpu.memory_space<vmem>>, %arg5: memref<1x128xf32, #tpu.memory_space<vmem>>, %arg6: memref<16x128xbf16, #tpu.memory_space<vmem>>, %arg7: memref<16x128xf32, #tpu.memory_space<vmem>>) attributes {dimension_semantics = [#tpu.dimension_semantics<parallel>, #tpu.dimension_semantics<parallel>, #tpu.dimension_semantics<arbitrary>], iteration_bounds = array<i64: 1, 4, 1>, scalar_prefetch = 0 : i64, scratch_operands = 1 : i64, tpu.core_type = #tpu.core_type<tc>, window_params = [{transform_indices = @transform_0, window_bounds = array<i64: 16, 128>}, {transform_indices = @transform_1, window_bounds = array<i64: 128, 128>}, {transform_indices = @transform_2, window_bounds = array<i64: 1, 128>}, {transform_indices = @transform_3, window_bounds = array<i64: 16, 128>}]} {
    %c0_i32 = arith.constant 0 : i32
    %0 = arith.cmpi eq, %arg2, %c0_i32 : i32
    %1 = arith.extui %0 : i1 to i32
    %c0_i32_0 = arith.constant 0 : i32
    %2 = arith.cmpi ne, %1, %c0_i32_0 : i32
    scf.if %2 {
      %cst_10 = arith.constant 0.000000e+00 : f32
      %12 = vector.broadcast %cst_10 : f32 to vector<16x128xf32>
      %c0_11 = arith.constant 0 : index
      %c0_12 = arith.constant 0 : index
      %13 = vector.load %arg7[%c0_11, %c0_12] : memref<16x128xf32, #tpu.memory_space<vmem>>, vector<16x128xf32>
      tpu.vector_store %arg7[%c0_11, %c0_12], %12 {strides = array<i32>} : memref<16x128xf32, #tpu.memory_space<vmem>>, vector<16x128xf32>,
    } else {
    }
    %c0 = arith.constant 0 : index
    %c0_1 = arith.constant 0 : index
    %3 = vector.load %arg7[%c0, %c0_1] : memref<16x128xf32, #tpu.memory_space<vmem>>, vector<16x128xf32>
    %c0_2 = arith.constant 0 : index
    %c0_3 = arith.constant 0 : index
    %4 = vector.load %arg3[%c0_2, %c0_3] : memref<16x128xbf16, #tpu.memory_space<vmem>>, vector<16x128xbf16>
    %c0_4 = arith.constant 0 : index
    %c0_5 = arith.constant 0 : index
    %5 = vector.load %arg4[%c0_4, %c0_5] : memref<128x128xbf16, #tpu.memory_space<vmem>>, vector<128x128xbf16>
    %cst = arith.constant dense<0.000000e+00> : vector<16x128xf32>
    %6 = tpu.matmul %4, %5, %cst {dimension_numbers = #tpu.dot_dimension_numbers<[1], [0], [0], [1], [0, 0, 1, 1], [], []>} : vector<16x128xbf16>, vector<128x128xbf16>, vector<16x128xf32> -> vector<16x128xf32>
    %7 = arith.addf %3, %6 : vector<16x128xf32>
    %c0_6 = arith.constant 0 : index
    %c0_7 = arith.constant 0 : index
    %8 = vector.load %arg7[%c0_6, %c0_7] : memref<16x128xf32, #tpu.memory_space<vmem>>, vector<16x128xf32>
    tpu.vector_store %arg7[%c0_6, %c0_7], %7 {strides = array<i32>} : memref<16x128xf32, #tpu.memory_space<vmem>>, vector<16x128xf32>,
    %c0_i32_8 = arith.constant 0 : i32
    %9 = arith.cmpi eq, %arg2, %c0_i32_8 : i32
    %10 = arith.extui %9 : i1 to i32
    %c0_i32_9 = arith.constant 0 : i32
    %11 = arith.cmpi ne, %10, %c0_i32_9 : i32
    scf.if %11 {
      %c0_10 = arith.constant 0 : index
      %c0_11 = arith.constant 0 : index
      %12 = vector.load %arg7[%c0_10, %c0_11] : memref<16x128xf32, #tpu.memory_space<vmem>>, vector<16x128xf32>
      %c0_12 = arith.constant 0 : index
      %c0_13 = arith.constant 0 : index
      %13 = vector.load %arg5[%c0_12, %c0_13] : memref<1x128xf32, #tpu.memory_space<vmem>>, vector<1x128xf32>
      %14 = vector.broadcast %13 : vector<1x128xf32> to vector<16x128xf32>
      %15 = arith.addf %12, %14 : vector<16x128xf32>
      %cst_14 = arith.constant 0.000000e+00 : f32
      %16 = vector.broadcast %cst_14 : f32 to vector<16x128xf32>
      %17 = arith.subf %16, %15 : vector<16x128xf32>
      %18 = math.exp %17 : vector<16x128xf32>
      %cst_15 = arith.constant 1.000000e+00 : f32
      %19 = vector.broadcast %cst_15 : f32 to vector<16x128xf32>
      %20 = arith.addf %19, %18 : vector<16x128xf32>
      %21 = tpu.reciprocal %20 {approx = true} : vector<16x128xf32> -> vector<16x128xf32>
      %22 = arith.mulf %15, %21 : vector<16x128xf32>
      %23 = arith.truncf %22 : vector<16x128xf32> to vector<16x128xbf16>
      %c0_16 = arith.constant 0 : index
      %c0_17 = arith.constant 0 : index
      %24 = vector.load %arg6[%c0_16, %c0_17] : memref<16x128xbf16, #tpu.memory_space<vmem>>, vector<16x128xbf16>
      tpu.vector_store %arg6[%c0_16, %c0_17], %23 {strides = array<i32>} : memref<16x128xbf16, #tpu.memory_space<vmem>>, vector<16x128xbf16>,
    } else {
    }
    return
  }
  func.func @transform_0(%arg0: i32, %arg1: i32, %arg2: i32) -> (i32, i32) {
    %c0_i32 = arith.constant 0 : i32
    return %arg0, %arg2 : i32, i32
  }
  func.func @transform_1(%arg0: i32, %arg1: i32, %arg2: i32) -> (i32, i32) {
    %c0_i32 = arith.constant 0 : i32
    return %arg2, %arg1 : i32, i32
  }
  func.func @transform_2(%arg0: i32, %arg1: i32, %arg2: i32) -> (i32, i32) {
    %c0_i32 = arith.constant 0 : i32
    %c0_i32_0 = arith.constant 0 : i32
    return %c0_i32, %arg1 : i32, i32
  }
  func.func @transform_3(%arg0: i32, %arg1: i32, %arg2: i32) -> (i32, i32) {
    %c0_i32 = arith.constant 0 : i32
    return %arg0, %arg1 : i32, i32
  }
}

module attributes {stable_mosaic.version = 11 : i64} {
  func.func @_matmul_kernel(%arg0: i32, %arg1: i32, %arg2: i32, %arg3: memref<16x512xbf16, #tpu.memory_space<vmem>>, %arg4: memref<512x128xbf16, #tpu.memory_space<vmem>>, %arg5: memref<1x128xf32, #tpu.memory_space<vmem>>, %arg6: memref<16x128xbf16, #tpu.memory_space<vmem>>, %arg7: memref<16x128xf32, #tpu.memory_space<vmem>>) attributes {dimension_semantics = [#tpu.dimension_semantics<parallel>, #tpu.dimension_semantics<parallel>, #tpu.dimension_semantics<arbitrary>], iteration_bounds = array<i64: 1, 4, 1>, scalar_prefetch = 0 : i64, scratch_operands = 1 : i64, tpu.core_type = #tpu.core_type<tc>, window_params = [{transform_indices = @transform_0, window_bounds = array<i64: 16, 512>}, {transform_indices = @transform_1, window_bounds = array<i64: 512, 128>}, {transform_indices = @transform_2, window_bounds = array<i64: 1, 128>}, {transform_indices = @transform_3, window_bounds = array<i64: 16, 128>}]} {
    %c0_i32 = arith.constant 0 : i32
    %0 = arith.cmpi eq, %arg2, %c0_i32 : i32
    %1 = arith.extui %0 : i1 to i32
    %c0_i32_0 = arith.constant 0 : i32
    %2 = arith.cmpi ne, %1, %c0_i32_0 : i32
    scf.if %2 {
      %cst_10 = arith.constant 0.000000e+00 : f32
      %12 = vector.broadcast %cst_10 : f32 to vector<16x128xf32>
      %c0_11 = arith.constant 0 : index
      %c0_12 = arith.constant 0 : index
      %13 = vector.load %arg7[%c0_11, %c0_12] : memref<16x128xf32, #tpu.memory_space<vmem>>, vector<16x128xf32>
      tpu.vector_store %arg7[%c0_11, %c0_12], %12 {strides = array<i32>} : memref<16x128xf32, #tpu.memory_space<vmem>>, vector<16x128xf32>,
    } else {
    }
    %c0 = arith.constant 0 : index
    %c0_1 = arith.constant 0 : index
    %3 = vector.load %arg7[%c0, %c0_1] : memref<16x128xf32, #tpu.memory_space<vmem>>, vector<16x128xf32>
    %c0_2 = arith.constant 0 : index
    %c0_3 = arith.constant 0 : index
    %4 = vector.load %arg3[%c0_2, %c0_3] : memref<16x512xbf16, #tpu.memory_space<vmem>>, vector<16x512xbf16>
    %c0_4 = arith.constant 0 : index
    %c0_5 = arith.constant 0 : index
    %5 = vector.load %arg4[%c0_4, %c0_5] : memref<512x128xbf16, #tpu.memory_space<vmem>>, vector<512x128xbf16>
    %cst = arith.constant dense<0.000000e+00> : vector<16x128xf32>
    %6 = tpu.matmul %4, %5, %cst {dimension_numbers = #tpu.dot_dimension_numbers<[1], [0], [0], [1], [0, 0, 1, 1], [], []>} : vector<16x512xbf16>, vector<512x128xbf16>, vector<16x128xf32> -> vector<16x128xf32>
    %7 = arith.addf %3, %6 : vector<16x128xf32>
    %c0_6 = arith.constant 0 : index
    %c0_7 = arith.constant 0 : index
    %8 = vector.load %arg7[%c0_6, %c0_7] : memref<16x128xf32, #tpu.memory_space<vmem>>, vector<16x128xf32>
    tpu.vector_store %arg7[%c0_6, %c0_7], %7 {strides = array<i32>} : memref<16x128xf32, #tpu.memory_space<vmem>>, vector<16x128xf32>,
    %c0_i32_8 = arith.constant 0 : i32
    %9 = arith.cmpi eq, %arg2, %c0_i32_8 : i32
    %10 = arith.extui %9 : i1 to i32
    %c0_i32_9 = arith.constant 0 : i32
    %11 = arith.cmpi ne, %10, %c0_i32_9 : i32
    scf.if %11 {
      %c0_10 = arith.constant 0 : index
      %c0_11 = arith.constant 0 : index
      %12 = vector.load %arg7[%c0_10, %c0_11] : memref<16x128xf32, #tpu.memory_space<vmem>>, vector<16x128xf32>
      %c0_12 = arith.constant 0 : index
      %c0_13 = arith.constant 0 : index
      %13 = vector.load %arg5[%c0_12, %c0_13] : memref<1x128xf32, #tpu.memory_space<vmem>>, vector<1x128xf32>
      %14 = vector.broadcast %13 : vector<1x128xf32> to vector<16x128xf32>
      %15 = arith.addf %12, %14 : vector<16x128xf32>
      %cst_14 = arith.constant 0.000000e+00 : f32
      %16 = vector.broadcast %cst_14 : f32 to vector<16x128xf32>
      %17 = arith.subf %16, %15 : vector<16x128xf32>
      %18 = math.exp %17 : vector<16x128xf32>
      %cst_15 = arith.constant 1.000000e+00 : f32
      %19 = vector.broadcast %cst_15 : f32 to vector<16x128xf32>
      %20 = arith.addf %19, %18 : vector<16x128xf32>
      %21 = tpu.reciprocal %20 {approx = true} : vector<16x128xf32> -> vector<16x128xf32>
      %22 = arith.mulf %15, %21 : vector<16x128xf32>
      %23 = arith.truncf %22 : vector<16x128xf32> to vector<16x128xbf16>
      %c0_16 = arith.constant 0 : index
      %c0_17 = arith.constant 0 : index
      %24 = vector.load %arg6[%c0_16, %c0_17] : memref<16x128xbf16, #tpu.memory_space<vmem>>, vector<16x128xbf16>
      tpu.vector_store %arg6[%c0_16, %c0_17], %23 {strides = array<i32>} : memref<16x128xbf16, #tpu.memory_space<vmem>>, vector<16x128xbf16>,
    } else {
    }
    return
  }
  func.func @transform_0(%arg0: i32, %arg1: i32, %arg2: i32) -> (i32, i32) {
    %c0_i32 = arith.constant 0 : i32
    return %arg0, %arg2 : i32, i32
  }
  func.func @transform_1(%arg0: i32, %arg1: i32, %arg2: i32) -> (i32, i32) {
    %c0_i32 = arith.constant 0 : i32
    return %arg2, %arg1 : i32, i32
  }
  func.func @transform_2(%arg0: i32, %arg1: i32, %arg2: i32) -> (i32, i32) {
    %c0_i32 = arith.constant 0 : i32
    %c0_i32_0 = arith.constant 0 : i32
    return %c0_i32, %arg1 : i32, i32
  }
  func.func @transform_3(%arg0: i32, %arg1: i32, %arg2: i32) -> (i32, i32) {
    %c0_i32 = arith.constant 0 : i32
    return %arg0, %arg1 : i32, i32
  }
}

</mosaic_0001>

<llo_original>
// kernel: time_embed_forward.2
$region0: #{time_embed_forward.2}
  #allocation0 [shape = 'u32[]', space=smem, size = 0x4, offset = 0x4, fixed_abs, tag = 'smem constant byte address 0x4 - core index']
  #allocation1 [shape = 'u32[72,128]{1,0:T(1,128)}', space=vmem, size = 0x9000, scoped, tag = 'internal scratch']
  #allocation2 [shape = 'f32[16,128]{1,0:T(8,128)}', space=vmem, size = 0x2000, scoped, tag = 'scratch operand']
  %s0 = inlined_call_operand.vmem [shape: bf16[16,128], index: 0, kind: input, shape index: {}]
  %s1 = inlined_call_operand.vmem [shape: bf16[128,512], index: 1, kind: input, shape index: {}]
  %s2 = inlined_call_operand.vmem [shape: f32[1,512], index: 2, kind: input, shape index: {}]
  %s3 = inlined_call_operand.vmem [shape: bf16[16,512], index: 3, kind: output, shape index: {}]
  %s4 = sld [smem:[#allocation0]]
  $region131: #{time_embed_forward.2} parent=0
    _
  %s6 = ssub.s32 1, %s4
  %s7 = scalar_select 0, %s6, %s4
  $region1: #{time_embed_forward.2} parent=0
    #allocation3 [shape = 'u8[65536]{0}', space=vmem, size = 0x10000, scoped, tag = 'input window, operand 1']
    #allocation4 [shape = 'u8[8192]{0}', space=vmem, size = 0x2000, scoped, tag = 'output window, operand 0']
    loop: start=0, step=1, limit=6
    $region2: #{time_embed_forward.2} parent=1 // loop_pre_header
      _
    $region3: #{time_embed_forward.2} parent=1 // loop_header
      %s9 = sphi 0, %s13
      %p10 = scmp.ge.s32.totalorder %s9, 6
      %s16 = sphi 0, %s35
      %s17 = sphi 0, %s31
      %s18 = sphi 0, %s27
      %s19 = sphi 0, %s16
      %s20 = sphi 0, %s17
      %s21 = sphi 0, %s18
      %s22 = sphi 0, %s19
      %s23 = sphi 0, %s20
      %s24 = sphi 0, %s21
      %s40 = sphi 0, %s42
      %s43 = sphi 0, %s40
      %s44 = sphi 0, %s43
      %s60 = sphi 0, %s44
      %s68 = sphi 0, %s70
      %s71 = sphi 0, %s68
      %s72 = sphi 0, %s71
      %s88 = sphi 0, %s72
      %s94 = sphi 0, %s96
      %s97 = sphi 0, %s94
      %s98 = sphi 0, %s97
      %s114 = sphi 0, %s98
      %s122 = sphi 0, %s124
      %s125 = sphi 0, %s122
      %s126 = sphi 0, %s125
      %s142 = sphi 0, %s126
    $region4: #{time_embed_forward.2} parent=1 // loop_header_branch
      %12 = sbr.rel (%p10) target = $region8
    $region5: #{time_embed_forward.2} parent=1 // loop_body
      %s14 = ssub.s32 %s9, 1
      %s15 = ssub.s32 %s9, 2
      %s25 = sadd.s32 1, %s18
      %p26 = scmp.ge.s32.totalorder %s25, 1
      %s27 = scalar_select %p26, 0, %s25
      %s28 = sadd.s32 1, %s17
      %s29 = scalar_select %p26, %s28, %s17
      %p30 = scmp.ge.s32.totalorder %s29, 4
      %s31 = scalar_select %p30, 0, %s29
      %s32 = sadd.s32 1, %s16
      %s33 = scalar_select %p30, %s32, %s16
      %p34 = scmp.ge.s32.totalorder %s33, 1
      %s35 = scalar_select %p34, 0, %s33
      %s36 = ssub.s32 %s16, %s35
      %s37 = ssub.s32 %s18, %s27
      %s38 = sor.u32 %s36, %s37
      %p39 = scmp.eq.s32.totalorder %s38, 0
      %s41 = sadd.s32 %s40, 1
      %s42 = scalar_select %p39, %s40, %s41
      %p45 = pneg %p39
      %p46 = scmp.eq.s32.totalorder %s9, 3
      %p47 = por %p45, %p46
      %p48 = scmp.ne.s32.totalorder %s40, %s43
      %p49 = scmp.eq.s32.totalorder %s9, 0
      %p50 = por %p48, %p49
      %p51 = scmp.ne.s32.totalorder %s40, %s43
      %p52 = scmp.eq.s32.totalorder %s14, 3
      %p53 = por %p51, %p52
      %p54 = scmp.ne.s32.totalorder %s43, %s44
      %p55 = scmp.eq.s32.totalorder %s14, 0
      %p56 = por %p54, %p55
      %p57 = scmp.ne.s32.totalorder %s43, %s44
      %p58 = scmp.eq.s32.totalorder %s15, 3
      %p59 = por %p57, %p58
      %p61 = scmp.ne.s32.totalorder %s44, %s60
      %p62 = scmp.eq.s32.totalorder %s15, 0
      %p63 = por %p61, %p62
      %s64 = ssub.s32 %s18, %s27
      %s65 = ssub.s32 %s17, %s31
      %s66 = sor.u32 %s64, %s65
      %p67 = scmp.eq.s32.totalorder %s66, 0
      %s69 = sadd.s32 %s68, 1
      %s70 = scalar_select %p67, %s68, %s69
      %p73 = pneg %p67
      %p74 = scmp.eq.s32.totalorder %s9, 3
      %p75 = por %p73, %p74
      %p76 = scmp.ne.s32.totalorder %s68, %s71
      %p77 = scmp.eq.s32.totalorder %s9, 0
      %p78 = por %p76, %p77
      %p79 = scmp.ne.s32.totalorder %s68, %s71
      %p80 = scmp.eq.s32.totalorder %s14, 3
      %p81 = por %p79, %p80
      %p82 = scmp.ne.s32.totalorder %s71, %s72
      %p83 = scmp.eq.s32.totalorder %s14, 0
      %p84 = por %p82, %p83
      %p85 = scmp.ne.s32.totalorder %s71, %s72
      %p86 = scmp.eq.s32.totalorder %s15, 3
      %p87 = por %p85, %p86
      %p89 = scmp.ne.s32.totalorder %s72, %s88
      %p90 = scmp.eq.s32.totalorder %s15, 0
      %p91 = por %p89, %p90
      %s92 = ssub.s32 %s17, %s31
      %p93 = scmp.eq.s32.totalorder %s92, 0
      %s95 = sadd.s32 %s94, 1
      %s96 = scalar_select %p93, %s94, %s95
      %p99 = pneg %p93
      %p100 = scmp.eq.s32.totalorder %s9, 3
      %p101 = por %p99, %p100
      %p102 = scmp.ne.s32.totalorder %s94, %s97
      %p103 = scmp.eq.s32.totalorder %s9, 0
      %p104 = por %p102, %p103
      %p105 = scmp.ne.s32.totalorder %s94, %s97
      %p106 = scmp.eq.s32.totalorder %s14, 3
      %p107 = por %p105, %p106
      %p108 = scmp.ne.s32.totalorder %s97, %s98
      %p109 = scmp.eq.s32.totalorder %s14, 0
      %p110 = por %p108, %p109
      %p111 = scmp.ne.s32.totalorder %s97, %s98
      %p112 = scmp.eq.s32.totalorder %s15, 3
      %p113 = por %p111, %p112
      %p115 = scmp.ne.s32.totalorder %s98, %s114
      %p116 = scmp.eq.s32.totalorder %s15, 0
      %p117 = por %p115, %p116
      %s118 = ssub.s32 %s16, %s35
      %s119 = ssub.s32 %s17, %s31
      %s120 = sor.u32 %s118, %s119
      %p121 = scmp.eq.s32.totalorder %s120, 0
      %s123 = sadd.s32 %s122, 1
      %s124 = scalar_select %p121, %s122, %s123
      %p127 = pneg %p121
      %p128 = scmp.eq.s32.totalorder %s9, 3
      %p129 = por %p127, %p128
      %p130 = scmp.ne.s32.totalorder %s122, %s125
      %p131 = scmp.eq.s32.totalorder %s9, 0
      %p132 = por %p130, %p131
      %p133 = scmp.ne.s32.totalorder %s122, %s125
      %p134 = scmp.eq.s32.totalorder %s14, 3
      %p135 = por %p133, %p134
      %p136 = scmp.ne.s32.totalorder %s125, %s126
      %p137 = scmp.eq.s32.totalorder %s14, 0
      %p138 = por %p136, %p137
      %p139 = scmp.ne.s32.totalorder %s125, %s126
      %p140 = scmp.eq.s32.totalorder %s15, 3
      %p141 = por %p139, %p140
      %p143 = scmp.ne.s32.totalorder %s126, %s142
      %p144 = scmp.eq.s32.totalorder %s15, 0
      %p145 = por %p143, %p144
      %p146 = scmp.le.s32.totalorder 1, %s9
      %p147 = scmp.lt.s32.totalorder %s9, 5
      %p148 = pnand %p146, %p147
      %p149 = pneg %p148
      // Predicated region
      $region9: #{time_embed_forward.2} parent=5 // pred_check
        _
      $region10: #{time_embed_forward.2} parent=5 // pred_check_branch
        %151 = sbr.rel (%p148) target = $region12
      $region11: #{time_embed_forward.2} parent=5 // pred_region
        %s152 = ssub.s32 %s9, 1
        // Predicated region
        $region13: #{time_embed_forward.2} parent=11 // pred_check
          %p153 = pneg %p56
        $region14: #{time_embed_forward.2} parent=11 // pred_check_branch
          %155 = sbr.rel (%p153) target = $region16
        $region15: #{time_embed_forward.2} parent=11 // pred_region
          %s156 = smul.u32 2, %s19
          %p157 = scmp.lt.s32.totalorder %s156, 1
          %s158 = scalar_select %p157, %s156, 1
          %p159 = scmp.lt.s32.totalorder %s21, 0
          %s160 = scalar_select %p159, %s21, 0
          %s161 = sadd.s32 %s160, %s158
          %s162 = smul.addr %s161, 4
          %s163 = scalar_lea.vmem %s0, %s162
          %s164 = smul.u32 2, %s19
        $region16: #{time_embed_forward.2} parent=11 // pred_fallthru
          _
      $region12: #{time_embed_forward.2} parent=5 // pred_fallthru
        _
      %p165 = scmp.lt.s32.totalorder %s9, 4
      // Predicated region
      $region17: #{time_embed_forward.2} parent=5 // pred_check
        %p166 = pneg %p165
      $region18: #{time_embed_forward.2} parent=5 // pred_check_branch
        %168 = sbr.rel (%p166) target = $region20
      $region19: #{time_embed_forward.2} parent=5 // pred_region
        // Predicated region
        $region21: #{time_embed_forward.2} parent=19 // pred_check
          %p169 = pneg %p78
        $region22: #{time_embed_forward.2} parent=19 // pred_check_branch
          %171 = sbr.rel (%p169) target = $region24
        $region23: #{time_embed_forward.2} parent=19 // pred_region
          %s172 = sand.u32 %s68, 1
          %s173 = sand.u32 %s68, 1
          %s174 = smul.addr %s173, 64
          %s175 = scalar_lea.vmem [#allocation3], %s174
          %s176 = smul.u32 16, %s18
          %s177 = smul.addr %s176, 4
          %s178 = sadd.s32 %s17, %s177
          %s179 = smul.addr %s178, 4
          %s180 = scalar_lea.vmem %s1, %s179
          // Predicated region
          $region25: #{time_embed_forward.2} parent=23 // pred_check
            _
          $region26: #{time_embed_forward.2} parent=23 // pred_check_branch
            %182 = sbr.rel (0) target = $region28
          $region27: #{time_embed_forward.2} parent=23 // pred_region
            // Predicated region
            $region29: #{time_embed_forward.2} parent=27 // pred_check
              _
            $region30: #{time_embed_forward.2} parent=27 // pred_check_branch
              %184 = sbr.rel target = $region32
            $region31: #{time_embed_forward.2} parent=27 // pred_region
              // Predicated region
              $region44: #{time_embed_forward.2} parent=31 // pred_check
                _
              $region45: #{time_embed_forward.2} parent=31 // pred_check_branch
                %230 = sbr.rel (0) target = $region47
              $region46: #{time_embed_forward.2} parent=31 // pred_region
                loop: start=0, step=1, limit=1
                $region48: #{time_embed_forward.2} parent=46 // loop_pre_header
                  _
                $region49: #{time_embed_forward.2} parent=46 // loop_header
                  %s232 = sphi 0, %s236
                  %p233 = scmp.ge.s32.totalorder %s232, 1
                  %s237 = sphi %s180, %s180
                  %s238 = sphi %s175, %s175
                $region50: #{time_embed_forward.2} parent=46 // loop_header_branch
                  %235 = sbr.rel (%p233) target = $region54
                $region51: #{time_embed_forward.2} parent=46 // loop_body
                  _
                $region52: #{time_embed_forward.2} parent=46 // loop_footer
                  %s236 = sadd.s32 1, %s232
                $region53: #{time_embed_forward.2} parent=46 // loop_footer_branch
                  %231 = sbr.rel target = $region49
                $region54: #{time_embed_forward.2} parent=46 // loop_exit
                  _
                %s240 = ssub.s32 16, 1
                loop: start=0, step=1, limit=1
                $region55: #{time_embed_forward.2} parent=46 // loop_pre_header
                  _
                $region56: #{time_embed_forward.2} parent=46 // loop_header
                  %s242 = sphi 0, %s246
                  %p243 = scmp.ge.s32.totalorder %s242, 1
                  %s247 = sphi %s180, %s180
                  %s248 = sphi %s175, %s175
                $region57: #{time_embed_forward.2} parent=46 // loop_header_branch
                  %245 = sbr.rel (%p243) target = $region61
                $region58: #{time_embed_forward.2} parent=46 // loop_body
                  %v249 = vld [vmem:[%s247] sm:%s240]
                  %250 = vst [vmem:[%s248] sm:%s240] %v249
                  %v251 = vld [vmem:[%s247 + $0x10] sm:%s240]
                  %252 = vst [vmem:[%s248 + $0x4] sm:%s240] %v251
                  %v253 = vld [vmem:[%s247 + $0x20] sm:%s240]
                  %254 = vst [vmem:[%s248 + $0x8] sm:%s240] %v253
                  %v255 = vld [vmem:[%s247 + $0x30] sm:%s240]
                  %256 = vst [vmem:[%s248 + $0xc] sm:%s240] %v255
                  %v257 = vld [vmem:[%s247 + $0x40] sm:%s240]
                  %258 = vst [vmem:[%s248 + $0x10] sm:%s240] %v257
                  %v259 = vld [vmem:[%s247 + $0x50] sm:%s240]
                  %260 = vst [vmem:[%s248 + $0x14] sm:%s240] %v259
                  %v261 = vld [vmem:[%s247 + $0x60] sm:%s240]
                  %262 = vst [vmem:[%s248 + $0x18] sm:%s240] %v261
                  %v263 = vld [vmem:[%s247 + $0x70] sm:%s240]
                  %264 = vst [vmem:[%s248 + $0x1c] sm:%s240] %v263
                  %v265 = vld [vmem:[%s247 + $0x80] sm:%s240]
                  %266 = vst [vmem:[%s248 + $0x20] sm:%s240] %v265
                  %v267 = vld [vmem:[%s247 + $0x90] sm:%s240]
                  %268 = vst [vmem:[%s248 + $0x24] sm:%s240] %v267
                  %v269 = vld [vmem:[%s247 + $0xa0] sm:%s240]
                  %270 = vst [vmem:[%s248 + $0x28] sm:%s240] %v269
                  %v271 = vld [vmem:[%s247 + $0xb0] sm:%s240]
                  %272 = vst [vmem:[%s248 + $0x2c] sm:%s240] %v271
                  %v273 = vld [vmem:[%s247 + $0xc0] sm:%s240]
                  %274 = vst [vmem:[%s248 + $0x30] sm:%s240] %v273
                  %v275 = vld [vmem:[%s247 + $0xd0] sm:%s240]
                  %276 = vst [vmem:[%s248 + $0x34] sm:%s240] %v275
                  %v277 = vld [vmem:[%s247 + $0xe0] sm:%s240]
                  %278 = vst [vmem:[%s248 + $0x38] sm:%s240] %v277
                  %v279 = vld [vmem:[%s247 + $0xf0] sm:%s240]
                  %280 = vst [vmem:[%s248 + $0x3c] sm:%s240] %v279
                $region59: #{time_embed_forward.2} parent=46 // loop_footer
                  %s246 = sadd.s32 1, %s242
                $region60: #{time_embed_forward.2} parent=46 // loop_footer_branch
                  %241 = sbr.rel target = $region56
                $region61: #{time_embed_forward.2} parent=46 // loop_exit
                  _
              $region47: #{time_embed_forward.2} parent=31 // pred_fallthru
                _
            $region32: #{time_embed_forward.2} parent=27 // pred_fallthru
              _
            // Predicated region
            $region33: #{time_embed_forward.2} parent=27 // pred_check
              _
            $region34: #{time_embed_forward.2} parent=27 // pred_check_branch
              %186 = sbr.rel (0) target = $region36
            $region35: #{time_embed_forward.2} parent=27 // pred_region
              %s188 = ssub.s32 16, 1
              loop: start=0, step=1, limit=1
              $region37: #{time_embed_forward.2} parent=35 // loop_pre_header
                _
              $region38: #{time_embed_forward.2} parent=35 // loop_header
                %s190 = sphi 0, %s194
                %p191 = scmp.ge.s32.totalorder %s190, 1
                %s195 = sphi %s180, %s180
                %s196 = sphi %s175, %s175
              $region39: #{time_embed_forward.2} parent=35 // loop_header_branch
                %193 = sbr.rel (%p191) target = $region43
              $region40: #{time_embed_forward.2} parent=35 // loop_body
                %v197 = vld [vmem:[%s195] sm:%s188]
                %198 = vst [vmem:[%s196] sm:%s188] %v197
                %v199 = vld [vmem:[%s195 + $0x10] sm:%s188]
                %200 = vst [vmem:[%s196 + $0x4] sm:%s188] %v199
                %v201 = vld [vmem:[%s195 + $0x20] sm:%s188]
                %202 = vst [vmem:[%s196 + $0x8] sm:%s188] %v201
                %v203 = vld [vmem:[%s195 + $0x30] sm:%s188]
                %204 = vst [vmem:[%s196 + $0xc] sm:%s188] %v203
                %v205 = vld [vmem:[%s195 + $0x40] sm:%s188]
                %206 = vst [vmem:[%s196 + $0x10] sm:%s188] %v205
                %v207 = vld [vmem:[%s195 + $0x50] sm:%s188]
                %208 = vst [vmem:[%s196 + $0x14] sm:%s188] %v207
                %v209 = vld [vmem:[%s195 + $0x60] sm:%s188]
                %210 = vst [vmem:[%s196 + $0x18] sm:%s188] %v209
                %v211 = vld [vmem:[%s195 + $0x70] sm:%s188]
                %212 = vst [vmem:[%s196 + $0x1c] sm:%s188] %v211
                %v213 = vld [vmem:[%s195 + $0x80] sm:%s188]
                %214 = vst [vmem:[%s196 + $0x20] sm:%s188] %v213
                %v215 = vld [vmem:[%s195 + $0x90] sm:%s188]
                %216 = vst [vmem:[%s196 + $0x24] sm:%s188] %v215
                %v217 = vld [vmem:[%s195 + $0xa0] sm:%s188]
                %218 = vst [vmem:[%s196 + $0x28] sm:%s188] %v217
                %v219 = vld [vmem:[%s195 + $0xb0] sm:%s188]
                %220 = vst [vmem:[%s196 + $0x2c] sm:%s188] %v219
                %v221 = vld [vmem:[%s195 + $0xc0] sm:%s188]
                %222 = vst [vmem:[%s196 + $0x30] sm:%s188] %v221
                %v223 = vld [vmem:[%s195 + $0xd0] sm:%s188]
                %224 = vst [vmem:[%s196 + $0x34] sm:%s188] %v223
                %v225 = vld [vmem:[%s195 + $0xe0] sm:%s188]
                %226 = vst [vmem:[%s196 + $0x38] sm:%s188] %v225
                %v227 = vld [vmem:[%s195 + $0xf0] sm:%s188]
                %228 = vst [vmem:[%s196 + $0x3c] sm:%s188] %v227
              $region41: #{time_embed_forward.2} parent=35 // loop_footer
                %s194 = sadd.s32 1, %s190
              $region42: #{time_embed_forward.2} parent=35 // loop_footer_branch
                %189 = sbr.rel target = $region38
              $region43: #{time_embed_forward.2} parent=35 // loop_exit
                _
            $region36: #{time_embed_forward.2} parent=27 // pred_fallthru
              _
          $region28: #{time_embed_forward.2} parent=23 // pred_fallthru
            _
          %281 = vnop
        $region24: #{time_embed_forward.2} parent=19 // pred_fallthru
          _
        // Predicated region
        $region62: #{time_embed_forward.2} parent=19 // pred_check
          %p282 = pneg %p104
        $region63: #{time_embed_forward.2} parent=19 // pred_check_branch
          %284 = sbr.rel (%p282) target = $region65
        $region64: #{time_embed_forward.2} parent=19 // pred_region
          %p285 = scmp.lt.s32.totalorder %s17, 3
          %s286 = scalar_select %p285, %s17, 3
          %s287 = scalar_lea.vmem %s2, %s286
        $region65: #{time_embed_forward.2} parent=19 // pred_fallthru
          _
      $region20: #{time_embed_forward.2} parent=5 // pred_fallthru
        _
      %p288 = scmp.le.s32.totalorder 1, %s9
      %p289 = scmp.lt.s32.totalorder %s9, 5
      %p290 = pnand %p288, %p289
      %p291 = pneg %p290
      // Predicated region
      $region66: #{time_embed_forward.2} parent=5 // pred_check
        _
      $region67: #{time_embed_forward.2} parent=5 // pred_check_branch
        %293 = sbr.rel (%p290) target = $region69
      $region68: #{time_embed_forward.2} parent=5 // pred_region
        %s294 = ssub.s32 %s9, 1
        %s295 = sand.u32 %s71, 1
        %s296 = sand.u32 %s71, 1
        %s297 = smul.addr %s296, 64
        %s298 = scalar_lea.vmem [#allocation3], %s297
        // Predicated region
        $region70: #{time_embed_forward.2} parent=68 // pred_check
          %p299 = pneg %p84
        $region71: #{time_embed_forward.2} parent=68 // pred_check_branch
          %301 = sbr.rel (%p299) target = $region73
        $region72: #{time_embed_forward.2} parent=68 // pred_region
          _
        $region73: #{time_embed_forward.2} parent=68 // pred_fallthru
          _
        %s302 = smul.u32 2, %s19
        %p303 = scmp.lt.s32.totalorder %s302, 1
        %s304 = scalar_select %p303, %s302, 1
        %p305 = scmp.lt.s32.totalorder %s21, 0
        %s306 = scalar_select %p305, %s21, 0
        %s307 = sadd.s32 %s306, %s304
        %s308 = smul.addr %s307, 4
        %s309 = scalar_lea.vmem %s0, %s308
        %p310 = pneg %p56
        %p311 = pneg %p53
        %s312 = sand.u32 %s71, 1
        %s313 = sand.u32 %s71, 1
        %s314 = smul.addr %s313, 64
        %s315 = scalar_lea.vmem [#allocation3], %s314
        %p316 = pneg %p84
        %p317 = pneg %p81
        %p318 = scmp.lt.s32.totalorder %s20, 3
        %s319 = scalar_select %p318, %s20, 3
        %s320 = scalar_lea.vmem %s2, %s319
        %p321 = pneg %p110
        %p322 = pneg %p107
        %p323 = pneg %p138
        %p324 = pneg %p135
        %s325 = sand.u32 %s125, 1
        %s326 = sand.u32 %s125, 1
        %s327 = smul.addr %s326, 8
        %s328 = scalar_lea.vmem [#allocation4], %s327
        %s329 = smul.u32 2, %s19
        %p330 = scmp.lt.s32.totalorder %s329, 1
        %s331 = scalar_select %p330, %s329, 1
        %p332 = scmp.lt.s32.totalorder %s21, 0
        %s333 = scalar_select %p332, %s21, 0
        %s334 = sadd.s32 %s333, %s331
        %s335 = smul.addr %s334, 4
        %s336 = scalar_lea.vmem %s0, %s335
        %s337 = smul.u32 2, %s19
        %s338 = smul.u32 16, %s21
        %p339 = scmp.lt.s32.totalorder %s20, 3
        %s340 = scalar_select %p339, %s20, 3
        %s341 = scalar_lea.vmem %s2, %s340
        %s342 = smul.u32 2, %s19
        %p343 = scmp.eq.s32.totalorder %s21, 0
        // Predicated region
        $region74: #{time_embed_forward.2} parent=68 // pred_check
          %p344 = pneg %p343
        $region75: #{time_embed_forward.2} parent=68 // pred_check_branch
          %346 = sbr.rel (%p344) target = $region77
        $region76: #{time_embed_forward.2} parent=68 // pred_region
          %347 = vst [vmem:[#allocation2] sm:$0xff] 0.0
          %348 = vst [vmem:[#allocation2 + $0x8] sm:$0xff] 0.0
        $region77: #{time_embed_forward.2} parent=68 // pred_fallthru
          _
        %v349 = vld [vmem:[#allocation2] sm:$0xff]
        %v350 = vld [vmem:[#allocation2 + $0x8] sm:$0xff]
        %v351 = vld [vmem:[%s336] sm:$0xf]
        %v352 = vld [vmem:[%s336 + $0x4] sm:$0xf]
        %v353 = vld [vmem:[%s298] sm:$0xf]
        %v354 = vld [vmem:[%s298 + $0x4] sm:$0xf]
        %v355 = vld [vmem:[%s298 + $0x8] sm:$0xf]
        %v356 = vld [vmem:[%s298 + $0xc] sm:$0xf]
        %v357 = vld [vmem:[%s298 + $0x10] sm:$0xf]
        %v358 = vld [vmem:[%s298 + $0x14] sm:$0xf]
        %v359 = vld [vmem:[%s298 + $0x18] sm:$0xf]
        %v360 = vld [vmem:[%s298 + $0x1c] sm:$0xf]
        %v361 = vld [vmem:[%s298 + $0x20] sm:$0xf]
        %v362 = vld [vmem:[%s298 + $0x24] sm:$0xf]
        %v363 = vld [vmem:[%s298 + $0x28] sm:$0xf]
        %v364 = vld [vmem:[%s298 + $0x2c] sm:$0xf]
        %v365 = vld [vmem:[%s298 + $0x30] sm:$0xf]
        %v366 = vld [vmem:[%s298 + $0x34] sm:$0xf]
        %v367 = vld [vmem:[%s298 + $0x38] sm:$0xf]
        %v368 = vld [vmem:[%s298 + $0x3c] sm:$0xf]
        %v371 = vunpack.c.l.b16 %v351
        %v372 = vunpack.c.l.b16 %v352
        %v373 = vpack.c.b16 %v372, %v371
        %v391 = vunpack.c.l.b16 %v353
        %v392 = vunpack.c.l.b16 %v354
        %v393 = vunpack.c.l.b16 %v355
        %v394 = vunpack.c.l.b16 %v356
        %v395 = vunpack.c.l.b16 %v357
        %v396 = vunpack.c.l.b16 %v358
        %v397 = vunpack.c.l.b16 %v359
        %v398 = vunpack.c.l.b16 %v360
        %v399 = vunpack.c.l.b16 %v361
        %v400 = vunpack.c.l.b16 %v362
        %v401 = vunpack.c.l.b16 %v363
        %v402 = vunpack.c.l.b16 %v364
        %v403 = vunpack.c.l.b16 %v365
        %v404 = vunpack.c.l.b16 %v366
        %v405 = vunpack.c.l.b16 %v367
        %v406 = vunpack.c.l.b16 %v368
        %v407 = vpack.c.b16 %v392, %v391
        %v408 = vpack.c.b16 %v394, %v393
        %v409 = vpack.c.b16 %v396, %v395
        %v410 = vpack.c.b16 %v398, %v397
        %v411 = vpack.c.b16 %v400, %v399
        %v412 = vpack.c.b16 %v402, %v401
        %v413 = vpack.c.b16 %v404, %v403
        %v414 = vpack.c.b16 %v406, %v405
        %423 = vmatpush.bf16.msra.mxu0 %v414
        %424 = vmatpush.bf16.msra.mxu0 %v413
        %425 = vmatpush.bf16.msra.mxu0 %v412
        %426 = vmatpush.bf16.msra.mxu0 %v411
        %427 = vmatpush.bf16.msra.mxu0 %v410
        %428 = vmatpush.bf16.msra.mxu0 %v409
        %429 = vmatpush.bf16.msra.mxu0 %v408
        %430 = vmatpush.bf16.msra.mxu0 %v407
        %431 = vmatmul.bf16.gmra.mxu0 %v373
        %v432 = vpop.f32.mrf.mxu0
        %v433 = vadd.f32 0.0, %v432
        %v434 = vpop.f32.mrf.mxu0
        %v435 = vadd.f32 0.0, %v434
        %436 = vdwg.mxu0
        %v437 = vadd.f32 %v349, %v433
        %v438 = vadd.f32 %v350, %v435
        %439 = vst [vmem:[#allocation2] sm:$0xff] %v437
        %440 = vst [vmem:[#allocation2 + $0x8] sm:$0xff] %v438
        // Predicated region
        $region78: #{time_embed_forward.2} parent=68 // pred_check
          %p441 = pneg %p343
        $region79: #{time_embed_forward.2} parent=68 // pred_check_branch
          %443 = sbr.rel (%p441) target = $region81
        $region80: #{time_embed_forward.2} parent=68 // pred_region
          %v444 = vld [vmem:[#allocation2] sm:$0xff]
          %v445 = vld [vmem:[#allocation2 + $0x8] sm:$0xff]
          %v446 = vld [vmem:[%s341] sm:$0x1]
          %v448 = vperm.slane %v446, 0
          %v450 = vadd.f32 %v444, %v448
          %v451 = vadd.f32 %v445, %v448
          %v452 = vsub.f32 0.0, %v450
          %v453 = vsub.f32 0.0, %v451
          %v454 = vmul.f32 %v452, 1.442695
          %v455 = vpow.pop %v454
          %v456 = vmul.f32 %v453, 1.442695
          %v457 = vpow.pop %v456
          %v458 = vadd.f32 %v455, 1.0
          %v459 = vadd.f32 %v457, 1.0
          %v460 = vrcp.pop %v458
          %v461 = vrcp.pop %v459
          %v462 = vmul.f32 %v450, %v460
          %v463 = vmul.f32 %v451, %v461
          %v464 = vpack.c.bf16 %v462, %v462
          %v465 = vpack.c.bf16 %v463, %v463
          %466 = vst [vmem:[%s328] sm:$0xf] %v464
          %467 = vst [vmem:[%s328 + $0x4] sm:$0xf] %v465
        $region81: #{time_embed_forward.2} parent=68 // pred_fallthru
          _
        %s468 = sand.u32 %s125, 1
        %s469 = sand.u32 %s125, 1
        %s470 = smul.addr %s469, 8
        %s471 = scalar_lea.vmem [#allocation4], %s470
        // Predicated region
        $region82: #{time_embed_forward.2} parent=68 // pred_check
          %p472 = pneg %p135
        $region83: #{time_embed_forward.2} parent=68 // pred_check_branch
          %474 = sbr.rel (%p472) target = $region85
        $region84: #{time_embed_forward.2} parent=68 // pred_region
          %s475 = smul.u32 2, %s19
          %s476 = smul.addr %s475, 4
          %s477 = sadd.s32 %s20, %s476
          %s478 = smul.addr %s477, 4
          %s479 = scalar_lea.vmem %s3, %s478
          // Predicated region
          $region86: #{time_embed_forward.2} parent=84 // pred_check
            _
          $region87: #{time_embed_forward.2} parent=84 // pred_check_branch
            %481 = sbr.rel (0) target = $region89
          $region88: #{time_embed_forward.2} parent=84 // pred_region
            // Predicated region
            $region90: #{time_embed_forward.2} parent=88 // pred_check
              _
            $region91: #{time_embed_forward.2} parent=88 // pred_check_branch
              %483 = sbr.rel target = $region93
            $region92: #{time_embed_forward.2} parent=88 // pred_region
              // Predicated region
              $region105: #{time_embed_forward.2} parent=92 // pred_check
                _
              $region106: #{time_embed_forward.2} parent=92 // pred_check_branch
                %501 = sbr.rel (0) target = $region108
              $region107: #{time_embed_forward.2} parent=92 // pred_region
                loop: start=0, step=1, limit=1
                $region109: #{time_embed_forward.2} parent=107 // loop_pre_header
                  _
                $region110: #{time_embed_forward.2} parent=107 // loop_header
                  %s503 = sphi 0, %s507
                  %p504 = scmp.ge.s32.totalorder %s503, 1
                  %s508 = sphi %s471, %s471
                  %s509 = sphi %s479, %s479
                $region111: #{time_embed_forward.2} parent=107 // loop_header_branch
                  %506 = sbr.rel (%p504) target = $region115
                $region112: #{time_embed_forward.2} parent=107 // loop_body
                  _
                $region113: #{time_embed_forward.2} parent=107 // loop_footer
                  %s507 = sadd.s32 1, %s503
                $region114: #{time_embed_forward.2} parent=107 // loop_footer_branch
                  %502 = sbr.rel target = $region110
                $region115: #{time_embed_forward.2} parent=107 // loop_exit
                  _
                %s511 = ssub.s32 16, 1
                loop: start=0, step=1, limit=1
                $region116: #{time_embed_forward.2} parent=107 // loop_pre_header
                  _
                $region117: #{time_embed_forward.2} parent=107 // loop_header
                  %s513 = sphi 0, %s517
                  %p514 = scmp.ge.s32.totalorder %s513, 1
                  %s518 = sphi %s471, %s471
                  %s519 = sphi %s479, %s479
                $region118: #{time_embed_forward.2} parent=107 // loop_header_branch
                  %516 = sbr.rel (%p514) target = $region122
                $region119: #{time_embed_forward.2} parent=107 // loop_body
                  %v520 = vld [vmem:[%s518] sm:%s511]
                  %521 = vst [vmem:[%s519] sm:%s511] %v520
                  %v522 = vld [vmem:[%s518 + $0x4] sm:%s511]
                  %523 = vst [vmem:[%s519 + $0x10] sm:%s511] %v522
                $region120: #{time_embed_forward.2} parent=107 // loop_footer
                  %s517 = sadd.s32 1, %s513
                $region121: #{time_embed_forward.2} parent=107 // loop_footer_branch
                  %512 = sbr.rel target = $region117
                $region122: #{time_embed_forward.2} parent=107 // loop_exit
                  _
              $region108: #{time_embed_forward.2} parent=92 // pred_fallthru
                _
            $region93: #{time_embed_forward.2} parent=88 // pred_fallthru
              _
            // Predicated region
            $region94: #{time_embed_forward.2} parent=88 // pred_check
              _
            $region95: #{time_embed_forward.2} parent=88 // pred_check_branch
              %485 = sbr.rel (0) target = $region97
            $region96: #{time_embed_forward.2} parent=88 // pred_region
              %s487 = ssub.s32 16, 1
              loop: start=0, step=1, limit=1
              $region98: #{time_embed_forward.2} parent=96 // loop_pre_header
                _
              $region99: #{time_embed_forward.2} parent=96 // loop_header
                %s489 = sphi 0, %s493
                %p490 = scmp.ge.s32.totalorder %s489, 1
                %s494 = sphi %s471, %s471
                %s495 = sphi %s479, %s479
              $region100: #{time_embed_forward.2} parent=96 // loop_header_branch
                %492 = sbr.rel (%p490) target = $region104
              $region101: #{time_embed_forward.2} parent=96 // loop_body
                %v496 = vld [vmem:[%s494] sm:%s487]
                %497 = vst [vmem:[%s495] sm:%s487] %v496
                %v498 = vld [vmem:[%s494 + $0x4] sm:%s487]
                %499 = vst [vmem:[%s495 + $0x10] sm:%s487] %v498
              $region102: #{time_embed_forward.2} parent=96 // loop_footer
                %s493 = sadd.s32 1, %s489
              $region103: #{time_embed_forward.2} parent=96 // loop_footer_branch
                %488 = sbr.rel target = $region99
              $region104: #{time_embed_forward.2} parent=96 // loop_exit
                _
            $region97: #{time_embed_forward.2} parent=88 // pred_fallthru
              _
          $region89: #{time_embed_forward.2} parent=84 // pred_fallthru
            _
          %524 = vnop
        $region85: #{time_embed_forward.2} parent=68 // pred_fallthru
          _
      $region69: #{time_embed_forward.2} parent=5 // pred_fallthru
        _
      %p525 = scmp.le.s32.totalorder 2, %s9
      // Predicated region
      $region123: #{time_embed_forward.2} parent=5 // pred_check
        %p526 = pneg %p525
      $region124: #{time_embed_forward.2} parent=5 // pred_check_branch
        %528 = sbr.rel (%p526) target = $region126
      $region125: #{time_embed_forward.2} parent=5 // pred_region
        %s529 = ssub.s32 %s9, 2
        // Predicated region
        $region127: #{time_embed_forward.2} parent=125 // pred_check
          %p530 = pneg %p141
        $region128: #{time_embed_forward.2} parent=125 // pred_check_branch
          %532 = sbr.rel (%p530) target = $region130
        $region129: #{time_embed_forward.2} parent=125 // pred_region
          %s533 = sand.u32 %s126, 1
          %s534 = sand.u32 %s126, 1
          %s535 = smul.addr %s534, 8
          %s536 = scalar_lea.vmem [#allocation4], %s535
        $region130: #{time_embed_forward.2} parent=125 // pred_fallthru
          _
      $region126: #{time_embed_forward.2} parent=5 // pred_fallthru
        _
    $region6: #{time_embed_forward.2} parent=1 // loop_footer
      %s13 = sadd.s32 1, %s9
    $region7: #{time_embed_forward.2} parent=1 // loop_footer_branch
      %8 = sbr.rel target = $region3
    $region8: #{time_embed_forward.2} parent=1 // loop_exit
      _

// kernel: time_embed_forward.3
$region0: #{time_embed_forward.3}
  #allocation0 [shape = 'u32[]', space=smem, size = 0x4, offset = 0x4, fixed_abs, tag = 'smem constant byte address 0x4 - core index']
  #allocation1 [shape = 'u32[72,128]{1,0:T(1,128)}', space=vmem, size = 0x9000, scoped, tag = 'internal scratch']
  #allocation2 [shape = 'f32[16,128]{1,0:T(8,128)}', space=vmem, size = 0x2000, scoped, tag = 'scratch operand']
  %s0 = inlined_call_operand.vmem [shape: bf16[16,512], index: 0, kind: input, shape index: {}]
  %s1 = inlined_call_operand.vmem [shape: bf16[512,512], index: 1, kind: input, shape index: {}]
  %s2 = inlined_call_operand.vmem [shape: f32[1,512], index: 2, kind: input, shape index: {}]
  %s3 = inlined_call_operand.vmem [shape: bf16[16,512], index: 3, kind: output, shape index: {}]
  %s4 = sld [smem:[#allocation0]]
  $region131: #{time_embed_forward.3} parent=0
    _
  %s6 = ssub.s32 1, %s4
  %s7 = scalar_select 0, %s6, %s4
  $region1: #{time_embed_forward.3} parent=0
    #allocation3 [shape = 'u8[262144]{0}', space=vmem, size = 0x40000, scoped, tag = 'input window, operand 1']
    #allocation4 [shape = 'u8[8192]{0}', space=vmem, size = 0x2000, scoped, tag = 'output window, operand 0']
    loop: start=0, step=1, limit=6
    $region2: #{time_embed_forward.3} parent=1 // loop_pre_header
      _
    $region3: #{time_embed_forward.3} parent=1 // loop_header
      %s9 = sphi 0, %s13
      %p10 = scmp.ge.s32.totalorder %s9, 6
      %s16 = sphi 0, %s35
      %s17 = sphi 0, %s31
      %s18 = sphi 0, %s27
      %s19 = sphi 0, %s16
      %s20 = sphi 0, %s17
      %s21 = sphi 0, %s18
      %s22 = sphi 0, %s19
      %s23 = sphi 0, %s20
      %s24 = sphi 0, %s21
      %s40 = sphi 0, %s42
      %s43 = sphi 0, %s40
      %s44 = sphi 0, %s43
      %s60 = sphi 0, %s44
      %s68 = sphi 0, %s70
      %s71 = sphi 0, %s68
      %s72 = sphi 0, %s71
      %s88 = sphi 0, %s72
      %s94 = sphi 0, %s96
      %s97 = sphi 0, %s94
      %s98 = sphi 0, %s97
      %s114 = sphi 0, %s98
      %s122 = sphi 0, %s124
      %s125 = sphi 0, %s122
      %s126 = sphi 0, %s125
      %s142 = sphi 0, %s126
    $region4: #{time_embed_forward.3} parent=1 // loop_header_branch
      %12 = sbr.rel (%p10) target = $region8
    $region5: #{time_embed_forward.3} parent=1 // loop_body
      %s14 = ssub.s32 %s9, 1
      %s15 = ssub.s32 %s9, 2
      %s25 = sadd.s32 1, %s18
      %p26 = scmp.ge.s32.totalorder %s25, 1
      %s27 = scalar_select %p26, 0, %s25
      %s28 = sadd.s32 1, %s17
      %s29 = scalar_select %p26, %s28, %s17
      %p30 = scmp.ge.s32.totalorder %s29, 4
      %s31 = scalar_select %p30, 0, %s29
      %s32 = sadd.s32 1, %s16
      %s33 = scalar_select %p30, %s32, %s16
      %p34 = scmp.ge.s32.totalorder %s33, 1
      %s35 = scalar_select %p34, 0, %s33
      %s36 = ssub.s32 %s16, %s35
      %s37 = ssub.s32 %s18, %s27
      %s38 = sor.u32 %s36, %s37
      %p39 = scmp.eq.s32.totalorder %s38, 0
      %s41 = sadd.s32 %s40, 1
      %s42 = scalar_select %p39, %s40, %s41
      %p45 = pneg %p39
      %p46 = scmp.eq.s32.totalorder %s9, 3
      %p47 = por %p45, %p46
      %p48 = scmp.ne.s32.totalorder %s40, %s43
      %p49 = scmp.eq.s32.totalorder %s9, 0
      %p50 = por %p48, %p49
      %p51 = scmp.ne.s32.totalorder %s40, %s43
      %p52 = scmp.eq.s32.totalorder %s14, 3
      %p53 = por %p51, %p52
      %p54 = scmp.ne.s32.totalorder %s43, %s44
      %p55 = scmp.eq.s32.totalorder %s14, 0
      %p56 = por %p54, %p55
      %p57 = scmp.ne.s32.totalorder %s43, %s44
      %p58 = scmp.eq.s32.totalorder %s15, 3
      %p59 = por %p57, %p58
      %p61 = scmp.ne.s32.totalorder %s44, %s60
      %p62 = scmp.eq.s32.totalorder %s15, 0
      %p63 = por %p61, %p62
      %s64 = ssub.s32 %s18, %s27
      %s65 = ssub.s32 %s17, %s31
      %s66 = sor.u32 %s64, %s65
      %p67 = scmp.eq.s32.totalorder %s66, 0
      %s69 = sadd.s32 %s68, 1
      %s70 = scalar_select %p67, %s68, %s69
      %p73 = pneg %p67
      %p74 = scmp.eq.s32.totalorder %s9, 3
      %p75 = por %p73, %p74
      %p76 = scmp.ne.s32.totalorder %s68, %s71
      %p77 = scmp.eq.s32.totalorder %s9, 0
      %p78 = por %p76, %p77
      %p79 = scmp.ne.s32.totalorder %s68, %s71
      %p80 = scmp.eq.s32.totalorder %s14, 3
      %p81 = por %p79, %p80
      %p82 = scmp.ne.s32.totalorder %s71, %s72
      %p83 = scmp.eq.s32.totalorder %s14, 0
      %p84 = por %p82, %p83
      %p85 = scmp.ne.s32.totalorder %s71, %s72
      %p86 = scmp.eq.s32.totalorder %s15, 3
      %p87 = por %p85, %p86
      %p89 = scmp.ne.s32.totalorder %s72, %s88
      %p90 = scmp.eq.s32.totalorder %s15, 0
      %p91 = por %p89, %p90
      %s92 = ssub.s32 %s17, %s31
      %p93 = scmp.eq.s32.totalorder %s92, 0
      %s95 = sadd.s32 %s94, 1
      %s96 = scalar_select %p93, %s94, %s95
      %p99 = pneg %p93
      %p100 = scmp.eq.s32.totalorder %s9, 3
      %p101 = por %p99, %p100
      %p102 = scmp.ne.s32.totalorder %s94, %s97
      %p103 = scmp.eq.s32.totalorder %s9, 0
      %p104 = por %p102, %p103
      %p105 = scmp.ne.s32.totalorder %s94, %s97
      %p106 = scmp.eq.s32.totalorder %s14, 3
      %p107 = por %p105, %p106
      %p108 = scmp.ne.s32.totalorder %s97, %s98
      %p109 = scmp.eq.s32.totalorder %s14, 0
      %p110 = por %p108, %p109
      %p111 = scmp.ne.s32.totalorder %s97, %s98
      %p112 = scmp.eq.s32.totalorder %s15, 3
      %p113 = por %p111, %p112
      %p115 = scmp.ne.s32.totalorder %s98, %s114
      %p116 = scmp.eq.s32.totalorder %s15, 0
      %p117 = por %p115, %p116
      %s118 = ssub.s32 %s16, %s35
      %s119 = ssub.s32 %s17, %s31
      %s120 = sor.u32 %s118, %s119
      %p121 = scmp.eq.s32.totalorder %s120, 0
      %s123 = sadd.s32 %s122, 1
      %s124 = scalar_select %p121, %s122, %s123
      %p127 = pneg %p121
      %p128 = scmp.eq.s32.totalorder %s9, 3
      %p129 = por %p127, %p128
      %p130 = scmp.ne.s32.totalorder %s122, %s125
      %p131 = scmp.eq.s32.totalorder %s9, 0
      %p132 = por %p130, %p131
      %p133 = scmp.ne.s32.totalorder %s122, %s125
      %p134 = scmp.eq.s32.totalorder %s14, 3
      %p135 = por %p133, %p134
      %p136 = scmp.ne.s32.totalorder %s125, %s126
      %p137 = scmp.eq.s32.totalorder %s14, 0
      %p138 = por %p136, %p137
      %p139 = scmp.ne.s32.totalorder %s125, %s126
      %p140 = scmp.eq.s32.totalorder %s15, 3
      %p141 = por %p139, %p140
      %p143 = scmp.ne.s32.totalorder %s126, %s142
      %p144 = scmp.eq.s32.totalorder %s15, 0
      %p145 = por %p143, %p144
      %p146 = scmp.le.s32.totalorder 1, %s9
      %p147 = scmp.lt.s32.totalorder %s9, 5
      %p148 = pnand %p146, %p147
      %p149 = pneg %p148
      // Predicated region
      $region9: #{time_embed_forward.3} parent=5 // pred_check
        _
      $region10: #{time_embed_forward.3} parent=5 // pred_check_branch
        %151 = sbr.rel (%p148) target = $region12
      $region11: #{time_embed_forward.3} parent=5 // pred_region
        %s152 = ssub.s32 %s9, 1
        // Predicated region
        $region13: #{time_embed_forward.3} parent=11 // pred_check
          %p153 = pneg %p56
        $region14: #{time_embed_forward.3} parent=11 // pred_check_branch
          %155 = sbr.rel (%p153) target = $region16
        $region15: #{time_embed_forward.3} parent=11 // pred_region
          %s156 = smul.u32 2, %s19
          %s157 = smul.u32 4, %s21
          %p158 = scmp.lt.s32.totalorder %s156, 1
          %s159 = scalar_select %p158, %s156, 1
          %p160 = scmp.lt.s32.totalorder %s157, 3
          %s161 = scalar_select %p160, %s157, 3
          %s162 = smul.addr %s159, 4
          %s163 = sadd.s32 %s161, %s162
          %s164 = smul.addr %s163, 4
          %s165 = scalar_lea.vmem %s0, %s164
          %s166 = smul.u32 2, %s19
          %s167 = smul.u32 4, %s21
        $region16: #{time_embed_forward.3} parent=11 // pred_fallthru
          _
      $region12: #{time_embed_forward.3} parent=5 // pred_fallthru
        _
      %p168 = scmp.lt.s32.totalorder %s9, 4
      // Predicated region
      $region17: #{time_embed_forward.3} parent=5 // pred_check
        %p169 = pneg %p168
      $region18: #{time_embed_forward.3} parent=5 // pred_check_branch
        %171 = sbr.rel (%p169) target = $region20
      $region19: #{time_embed_forward.3} parent=5 // pred_region
        // Predicated region
        $region21: #{time_embed_forward.3} parent=19 // pred_check
          %p172 = pneg %p78
        $region22: #{time_embed_forward.3} parent=19 // pred_check_branch
          %174 = sbr.rel (%p172) target = $region24
        $region23: #{time_embed_forward.3} parent=19 // pred_region
          %s175 = sand.u32 %s68, 1
          %s176 = sand.u32 %s68, 1
          %s177 = smul.addr %s176, 256
          %s178 = scalar_lea.vmem [#allocation3], %s177
          %s179 = smul.u32 64, %s18
          %s180 = smul.addr %s179, 4
          %s181 = sadd.s32 %s17, %s180
          %s182 = smul.addr %s181, 4
          %s183 = scalar_lea.vmem %s1, %s182
          // Predicated region
          $region25: #{time_embed_forward.3} parent=23 // pred_check
            _
          $region26: #{time_embed_forward.3} parent=23 // pred_check_branch
            %185 = sbr.rel (0) target = $region28
          $region27: #{time_embed_forward.3} parent=23 // pred_region
            // Predicated region
            $region29: #{time_embed_forward.3} parent=27 // pred_check
              _
            $region30: #{time_embed_forward.3} parent=27 // pred_check_branch
              %187 = sbr.rel target = $region32
            $region31: #{time_embed_forward.3} parent=27 // pred_region
              // Predicated region
              $region44: #{time_embed_forward.3} parent=31 // pred_check
                _
              $region45: #{time_embed_forward.3} parent=31 // pred_check_branch
                %329 = sbr.rel (0) target = $region47
              $region46: #{time_embed_forward.3} parent=31 // pred_region
                loop: start=0, step=1, limit=1
                $region48: #{time_embed_forward.3} parent=46 // loop_pre_header
                  _
                $region49: #{time_embed_forward.3} parent=46 // loop_header
                  %s331 = sphi 0, %s335
                  %p332 = scmp.ge.s32.totalorder %s331, 1
                  %s336 = sphi %s183, %s183
                  %s337 = sphi %s178, %s178
                $region50: #{time_embed_forward.3} parent=46 // loop_header_branch
                  %334 = sbr.rel (%p332) target = $region54
                $region51: #{time_embed_forward.3} parent=46 // loop_body
                  _
                $region52: #{time_embed_forward.3} parent=46 // loop_footer
                  %s335 = sadd.s32 1, %s331
                $region53: #{time_embed_forward.3} parent=46 // loop_footer_branch
                  %330 = sbr.rel target = $region49
                $region54: #{time_embed_forward.3} parent=46 // loop_exit
                  _
                %s339 = ssub.s32 16, 1
                loop: start=0, step=1, limit=1
                $region55: #{time_embed_forward.3} parent=46 // loop_pre_header
                  _
                $region56: #{time_embed_forward.3} parent=46 // loop_header
                  %s341 = sphi 0, %s345
                  %p342 = scmp.ge.s32.totalorder %s341, 1
                  %s346 = sphi %s183, %s183
                  %s347 = sphi %s178, %s178
                $region57: #{time_embed_forward.3} parent=46 // loop_header_branch
                  %344 = sbr.rel (%p342) target = $region61
                $region58: #{time_embed_forward.3} parent=46 // loop_body
                  %v348 = vld [vmem:[%s346] sm:%s339]
                  %349 = vst [vmem:[%s347] sm:%s339] %v348
                  %v350 = vld [vmem:[%s346 + $0x10] sm:%s339]
                  %351 = vst [vmem:[%s347 + $0x4] sm:%s339] %v350
                  %v352 = vld [vmem:[%s346 + $0x20] sm:%s339]
                  %353 = vst [vmem:[%s347 + $0x8] sm:%s339] %v352
                  %v354 = vld [vmem:[%s346 + $0x30] sm:%s339]
                  %355 = vst [vmem:[%s347 + $0xc] sm:%s339] %v354
                  %v356 = vld [vmem:[%s346 + $0x40] sm:%s339]
                  %357 = vst [vmem:[%s347 + $0x10] sm:%s339] %v356
                  %v358 = vld [vmem:[%s346 + $0x50] sm:%s339]
                  %359 = vst [vmem:[%s347 + $0x14] sm:%s339] %v358
                  %v360 = vld [vmem:[%s346 + $0x60] sm:%s339]
                  %361 = vst [vmem:[%s347 + $0x18] sm:%s339] %v360
                  %v362 = vld [vmem:[%s346 + $0x70] sm:%s339]
                  %363 = vst [vmem:[%s347 + $0x1c] sm:%s339] %v362
                  %v364 = vld [vmem:[%s346 + $0x80] sm:%s339]
                  %365 = vst [vmem:[%s347 + $0x20] sm:%s339] %v364
                  %v366 = vld [vmem:[%s346 + $0x90] sm:%s339]
                  %367 = vst [vmem:[%s347 + $0x24] sm:%s339] %v366
                  %v368 = vld [vmem:[%s346 + $0xa0] sm:%s339]
                  %369 = vst [vmem:[%s347 + $0x28] sm:%s339] %v368
                  %v370 = vld [vmem:[%s346 + $0xb0] sm:%s339]
                  %371 = vst [vmem:[%s347 + $0x2c] sm:%s339] %v370
                  %v372 = vld [vmem:[%s346 + $0xc0] sm:%s339]
                  %373 = vst [vmem:[%s347 + $0x30] sm:%s339] %v372
                  %v374 = vld [vmem:[%s346 + $0xd0] sm:%s339]
                  %375 = vst [vmem:[%s347 + $0x34] sm:%s339] %v374
                  %v376 = vld [vmem:[%s346 + $0xe0] sm:%s339]
                  %377 = vst [vmem:[%s347 + $0x38] sm:%s339] %v376
                  %v378 = vld [vmem:[%s346 + $0xf0] sm:%s339]
                  %379 = vst [vmem:[%s347 + $0x3c] sm:%s339] %v378
                  %v380 = vld [vmem:[%s346 + $0x100] sm:%s339]
                  %381 = vst [vmem:[%s347 + $0x40] sm:%s339] %v380
                  %v382 = vld [vmem:[%s346 + $0x110] sm:%s339]
                  %383 = vst [vmem:[%s347 + $0x44] sm:%s339] %v382
                  %v384 = vld [vmem:[%s346 + $0x120] sm:%s339]
                  %385 = vst [vmem:[%s347 + $0x48] sm:%s339] %v384
                  %v386 = vld [vmem:[%s346 + $0x130] sm:%s339]
                  %387 = vst [vmem:[%s347 + $0x4c] sm:%s339] %v386
                  %v388 = vld [vmem:[%s346 + $0x140] sm:%s339]
                  %389 = vst [vmem:[%s347 + $0x50] sm:%s339] %v388
                  %v390 = vld [vmem:[%s346 + $0x150] sm:%s339]
                  %391 = vst [vmem:[%s347 + $0x54] sm:%s339] %v390
                  %v392 = vld [vmem:[%s346 + $0x160] sm:%s339]
                  %393 = vst [vmem:[%s347 + $0x58] sm:%s339] %v392
                  %v394 = vld [vmem:[%s346 + $0x170] sm:%s339]
                  %395 = vst [vmem:[%s347 + $0x5c] sm:%s339] %v394
                  %v396 = vld [vmem:[%s346 + $0x180] sm:%s339]
                  %397 = vst [vmem:[%s347 + $0x60] sm:%s339] %v396
                  %v398 = vld [vmem:[%s346 + $0x190] sm:%s339]
                  %399 = vst [vmem:[%s347 + $0x64] sm:%s339] %v398
                  %v400 = vld [vmem:[%s346 + $0x1a0] sm:%s339]
                  %401 = vst [vmem:[%s347 + $0x68] sm:%s339] %v400
                  %v402 = vld [vmem:[%s346 + $0x1b0] sm:%s339]
                  %403 = vst [vmem:[%s347 + $0x6c] sm:%s339] %v402
                  %v404 = vld [vmem:[%s346 + $0x1c0] sm:%s339]
                  %405 = vst [vmem:[%s347 + $0x70] sm:%s339] %v404
                  %v406 = vld [vmem:[%s346 + $0x1d0] sm:%s339]
                  %407 = vst [vmem:[%s347 + $0x74] sm:%s339] %v406
                  %v408 = vld [vmem:[%s346 + $0x1e0] sm:%s339]
                  %409 = vst [vmem:[%s347 + $0x78] sm:%s339] %v408
                  %v410 = vld [vmem:[%s346 + $0x1f0] sm:%s339]
                  %411 = vst [vmem:[%s347 + $0x7c] sm:%s339] %v410
                  %v412 = vld [vmem:[%s346 + $0x200] sm:%s339]
                  %413 = vst [vmem:[%s347 + $0x80] sm:%s339] %v412
                  %v414 = vld [vmem:[%s346 + $0x210] sm:%s339]
                  %415 = vst [vmem:[%s347 + $0x84] sm:%s339] %v414
                  %v416 = vld [vmem:[%s346 + $0x220] sm:%s339]
                  %417 = vst [vmem:[%s347 + $0x88] sm:%s339] %v416
                  %v418 = vld [vmem:[%s346 + $0x230] sm:%s339]
                  %419 = vst [vmem:[%s347 + $0x8c] sm:%s339] %v418
                  %v420 = vld [vmem:[%s346 + $0x240] sm:%s339]
                  %421 = vst [vmem:[%s347 + $0x90] sm:%s339] %v420
                  %v422 = vld [vmem:[%s346 + $0x250] sm:%s339]
                  %423 = vst [vmem:[%s347 + $0x94] sm:%s339] %v422
                  %v424 = vld [vmem:[%s346 + $0x260] sm:%s339]
                  %425 = vst [vmem:[%s347 + $0x98] sm:%s339] %v424
                  %v426 = vld [vmem:[%s346 + $0x270] sm:%s339]
                  %427 = vst [vmem:[%s347 + $0x9c] sm:%s339] %v426
                  %v428 = vld [vmem:[%s346 + $0x280] sm:%s339]
                  %429 = vst [vmem:[%s347 + $0xa0] sm:%s339] %v428
                  %v430 = vld [vmem:[%s346 + $0x290] sm:%s339]
                  %431 = vst [vmem:[%s347 + $0xa4] sm:%s339] %v430
                  %v432 = vld [vmem:[%s346 + $0x2a0] sm:%s339]
                  %433 = vst [vmem:[%s347 + $0xa8] sm:%s339] %v432
                  %v434 = vld [vmem:[%s346 + $0x2b0] sm:%s339]
                  %435 = vst [vmem:[%s347 + $0xac] sm:%s339] %v434
                  %v436 = vld [vmem:[%s346 + $0x2c0] sm:%s339]
                  %437 = vst [vmem:[%s347 + $0xb0] sm:%s339] %v436
                  %v438 = vld [vmem:[%s346 + $0x2d0] sm:%s339]
                  %439 = vst [vmem:[%s347 + $0xb4] sm:%s339] %v438
                  %v440 = vld [vmem:[%s346 + $0x2e0] sm:%s339]
                  %441 = vst [vmem:[%s347 + $0xb8] sm:%s339] %v440
                  %v442 = vld [vmem:[%s346 + $0x2f0] sm:%s339]
                  %443 = vst [vmem:[%s347 + $0xbc] sm:%s339] %v442
                  %v444 = vld [vmem:[%s346 + $0x300] sm:%s339]
                  %445 = vst [vmem:[%s347 + $0xc0] sm:%s339] %v444
                  %v446 = vld [vmem:[%s346 + $0x310] sm:%s339]
                  %447 = vst [vmem:[%s347 + $0xc4] sm:%s339] %v446
                  %v448 = vld [vmem:[%s346 + $0x320] sm:%s339]
                  %449 = vst [vmem:[%s347 + $0xc8] sm:%s339] %v448
                  %v450 = vld [vmem:[%s346 + $0x330] sm:%s339]
                  %451 = vst [vmem:[%s347 + $0xcc] sm:%s339] %v450
                  %v452 = vld [vmem:[%s346 + $0x340] sm:%s339]
                  %453 = vst [vmem:[%s347 + $0xd0] sm:%s339] %v452
                  %v454 = vld [vmem:[%s346 + $0x350] sm:%s339]
                  %455 = vst [vmem:[%s347 + $0xd4] sm:%s339] %v454
                  %v456 = vld [vmem:[%s346 + $0x360] sm:%s339]
                  %457 = vst [vmem:[%s347 + $0xd8] sm:%s339] %v456
                  %v458 = vld [vmem:[%s346 + $0x370] sm:%s339]
                  %459 = vst [vmem:[%s347 + $0xdc] sm:%s339] %v458
                  %v460 = vld [vmem:[%s346 + $0x380] sm:%s339]
                  %461 = vst [vmem:[%s347 + $0xe0] sm:%s339] %v460
                  %v462 = vld [vmem:[%s346 + $0x390] sm:%s339]
                  %463 = vst [vmem:[%s347 + $0xe4] sm:%s339] %v462
                  %v464 = vld [vmem:[%s346 + $0x3a0] sm:%s339]
                  %465 = vst [vmem:[%s347 + $0xe8] sm:%s339] %v464
                  %v466 = vld [vmem:[%s346 + $0x3b0] sm:%s339]
                  %467 = vst [vmem:[%s347 + $0xec] sm:%s339] %v466
                  %v468 = vld [vmem:[%s346 + $0x3c0] sm:%s339]
                  %469 = vst [vmem:[%s347 + $0xf0] sm:%s339] %v468
                  %v470 = vld [vmem:[%s346 + $0x3d0] sm:%s339]
                  %471 = vst [vmem:[%s347 + $0xf4] sm:%s339] %v470
                  %v472 = vld [vmem:[%s346 + $0x3e0] sm:%s339]
                  %473 = vst [vmem:[%s347 + $0xf8] sm:%s339] %v472
                  %v474 = vld [vmem:[%s346 + $0x3f0] sm:%s339]
                  %475 = vst [vmem:[%s347 + $0xfc] sm:%s339] %v474
                $region59: #{time_embed_forward.3} parent=46 // loop_footer
                  %s345 = sadd.s32 1, %s341
                $region60: #{time_embed_forward.3} parent=46 // loop_footer_branch
                  %340 = sbr.rel target = $region56
                $region61: #{time_embed_forward.3} parent=46 // loop_exit
                  _
              $region47: #{time_embed_forward.3} parent=31 // pred_fallthru
                _
            $region32: #{time_embed_forward.3} parent=27 // pred_fallthru
              _
            // Predicated region
            $region33: #{time_embed_forward.3} parent=27 // pred_check
              _
            $region34: #{time_embed_forward.3} parent=27 // pred_check_branch
              %189 = sbr.rel (0) target = $region36
            $region35: #{time_embed_forward.3} parent=27 // pred_region
              %s191 = ssub.s32 16, 1
              loop: start=0, step=1, limit=1
              $region37: #{time_embed_forward.3} parent=35 // loop_pre_header
                _
              $region38: #{time_embed_forward.3} parent=35 // loop_header
                %s193 = sphi 0, %s197
                %p194 = scmp.ge.s32.totalorder %s193, 1
                %s198 = sphi %s183, %s183
                %s199 = sphi %s178, %s178
              $region39: #{time_embed_forward.3} parent=35 // loop_header_branch
                %196 = sbr.rel (%p194) target = $region43
              $region40: #{time_embed_forward.3} parent=35 // loop_body
                %v200 = vld [vmem:[%s198] sm:%s191]
                %201 = vst [vmem:[%s199] sm:%s191] %v200
                %v202 = vld [vmem:[%s198 + $0x10] sm:%s191]
                %203 = vst [vmem:[%s199 + $0x4] sm:%s191] %v202
                %v204 = vld [vmem:[%s198 + $0x20] sm:%s191]
                %205 = vst [vmem:[%s199 + $0x8] sm:%s191] %v204
                %v206 = vld [vmem:[%s198 + $0x30] sm:%s191]
                %207 = vst [vmem:[%s199 + $0xc] sm:%s191] %v206
                %v208 = vld [vmem:[%s198 + $0x40] sm:%s191]
                %209 = vst [vmem:[%s199 + $0x10] sm:%s191] %v208
                %v210 = vld [vmem:[%s198 + $0x50] sm:%s191]
                %211 = vst [vmem:[%s199 + $0x14] sm:%s191] %v210
                %v212 = vld [vmem:[%s198 + $0x60] sm:%s191]
                %213 = vst [vmem:[%s199 + $0x18] sm:%s191] %v212
                %v214 = vld [vmem:[%s198 + $0x70] sm:%s191]
                %215 = vst [vmem:[%s199 + $0x1c] sm:%s191] %v214
                %v216 = vld [vmem:[%s198 + $0x80] sm:%s191]
                %217 = vst [vmem:[%s199 + $0x20] sm:%s191] %v216
                %v218 = vld [vmem:[%s198 + $0x90] sm:%s191]
                %219 = vst [vmem:[%s199 + $0x24] sm:%s191] %v218
                %v220 = vld [vmem:[%s198 + $0xa0] sm:%s191]
                %221 = vst [vmem:[%s199 + $0x28] sm:%s191] %v220
                %v222 = vld [vmem:[%s198 + $0xb0] sm:%s191]
                %223 = vst [vmem:[%s199 + $0x2c] sm:%s191] %v222
                %v224 = vld [vmem:[%s198 + $0xc0] sm:%s191]
                %225 = vst [vmem:[%s199 + $0x30] sm:%s191] %v224
                %v226 = vld [vmem:[%s198 + $0xd0] sm:%s191]
                %227 = vst [vmem:[%s199 + $0x34] sm:%s191] %v226
                %v228 = vld [vmem:[%s198 + $0xe0] sm:%s191]
                %229 = vst [vmem:[%s199 + $0x38] sm:%s191] %v228
                %v230 = vld [vmem:[%s198 + $0xf0] sm:%s191]
                %231 = vst [vmem:[%s199 + $0x3c] sm:%s191] %v230
                %v232 = vld [vmem:[%s198 + $0x100] sm:%s191]
                %233 = vst [vmem:[%s199 + $0x40] sm:%s191] %v232
                %v234 = vld [vmem:[%s198 + $0x110] sm:%s191]
                %235 = vst [vmem:[%s199 + $0x44] sm:%s191] %v234
                %v236 = vld [vmem:[%s198 + $0x120] sm:%s191]
                %237 = vst [vmem:[%s199 + $0x48] sm:%s191] %v236
                %v238 = vld [vmem:[%s198 + $0x130] sm:%s191]
                %239 = vst [vmem:[%s199 + $0x4c] sm:%s191] %v238
                %v240 = vld [vmem:[%s198 + $0x140] sm:%s191]
                %241 = vst [vmem:[%s199 + $0x50] sm:%s191] %v240
                %v242 = vld [vmem:[%s198 + $0x150] sm:%s191]
                %243 = vst [vmem:[%s199 + $0x54] sm:%s191] %v242
                %v244 = vld [vmem:[%s198 + $0x160] sm:%s191]
                %245 = vst [vmem:[%s199 + $0x58] sm:%s191] %v244
                %v246 = vld [vmem:[%s198 + $0x170] sm:%s191]
                %247 = vst [vmem:[%s199 + $0x5c] sm:%s191] %v246
                %v248 = vld [vmem:[%s198 + $0x180] sm:%s191]
                %249 = vst [vmem:[%s199 + $0x60] sm:%s191] %v248
                %v250 = vld [vmem:[%s198 + $0x190] sm:%s191]
                %251 = vst [vmem:[%s199 + $0x64] sm:%s191] %v250
                %v252 = vld [vmem:[%s198 + $0x1a0] sm:%s191]
                %253 = vst [vmem:[%s199 + $0x68] sm:%s191] %v252
                %v254 = vld [vmem:[%s198 + $0x1b0] sm:%s191]
                %255 = vst [vmem:[%s199 + $0x6c] sm:%s191] %v254
                %v256 = vld [vmem:[%s198 + $0x1c0] sm:%s191]
                %257 = vst [vmem:[%s199 + $0x70] sm:%s191] %v256
                %v258 = vld [vmem:[%s198 + $0x1d0] sm:%s191]
                %259 = vst [vmem:[%s199 + $0x74] sm:%s191] %v258
                %v260 = vld [vmem:[%s198 + $0x1e0] sm:%s191]
                %261 = vst [vmem:[%s199 + $0x78] sm:%s191] %v260
                %v262 = vld [vmem:[%s198 + $0x1f0] sm:%s191]
                %263 = vst [vmem:[%s199 + $0x7c] sm:%s191] %v262
                %v264 = vld [vmem:[%s198 + $0x200] sm:%s191]
                %265 = vst [vmem:[%s199 + $0x80] sm:%s191] %v264
                %v266 = vld [vmem:[%s198 + $0x210] sm:%s191]
                %267 = vst [vmem:[%s199 + $0x84] sm:%s191] %v266
                %v268 = vld [vmem:[%s198 + $0x220] sm:%s191]
                %269 = vst [vmem:[%s199 + $0x88] sm:%s191] %v268
                %v270 = vld [vmem:[%s198 + $0x230] sm:%s191]
                %271 = vst [vmem:[%s199 + $0x8c] sm:%s191] %v270
                %v272 = vld [vmem:[%s198 + $0x240] sm:%s191]
                %273 = vst [vmem:[%s199 + $0x90] sm:%s191] %v272
                %v274 = vld [vmem:[%s198 + $0x250] sm:%s191]
                %275 = vst [vmem:[%s199 + $0x94] sm:%s191] %v274
                %v276 = vld [vmem:[%s198 + $0x260] sm:%s191]
                %277 = vst [vmem:[%s199 + $0x98] sm:%s191] %v276
                %v278 = vld [vmem:[%s198 + $0x270] sm:%s191]
                %279 = vst [vmem:[%s199 + $0x9c] sm:%s191] %v278
                %v280 = vld [vmem:[%s198 + $0x280] sm:%s191]
                %281 = vst [vmem:[%s199 + $0xa0] sm:%s191] %v280
                %v282 = vld [vmem:[%s198 + $0x290] sm:%s191]
                %283 = vst [vmem:[%s199 + $0xa4] sm:%s191] %v282
                %v284 = vld [vmem:[%s198 + $0x2a0] sm:%s191]
                %285 = vst [vmem:[%s199 + $0xa8] sm:%s191] %v284
                %v286 = vld [vmem:[%s198 + $0x2b0] sm:%s191]
                %287 = vst [vmem:[%s199 + $0xac] sm:%s191] %v286
                %v288 = vld [vmem:[%s198 + $0x2c0] sm:%s191]
                %289 = vst [vmem:[%s199 + $0xb0] sm:%s191] %v288
                %v290 = vld [vmem:[%s198 + $0x2d0] sm:%s191]
                %291 = vst [vmem:[%s199 + $0xb4] sm:%s191] %v290
                %v292 = vld [vmem:[%s198 + $0x2e0] sm:%s191]
                %293 = vst [vmem:[%s199 + $0xb8] sm:%s191] %v292
                %v294 = vld [vmem:[%s198 + $0x2f0] sm:%s191]
                %295 = vst [vmem:[%s199 + $0xbc] sm:%s191] %v294
                %v296 = vld [vmem:[%s198 + $0x300] sm:%s191]
                %297 = vst [vmem:[%s199 + $0xc0] sm:%s191] %v296
                %v298 = vld [vmem:[%s198 + $0x310] sm:%s191]
                %299 = vst [vmem:[%s199 + $0xc4] sm:%s191] %v298
                %v300 = vld [vmem:[%s198 + $0x320] sm:%s191]
                %301 = vst [vmem:[%s199 + $0xc8] sm:%s191] %v300
                %v302 = vld [vmem:[%s198 + $0x330] sm:%s191]
                %303 = vst [vmem:[%s199 + $0xcc] sm:%s191] %v302
                %v304 = vld [vmem:[%s198 + $0x340] sm:%s191]
                %305 = vst [vmem:[%s199 + $0xd0] sm:%s191] %v304
                %v306 = vld [vmem:[%s198 + $0x350] sm:%s191]
                %307 = vst [vmem:[%s199 + $0xd4] sm:%s191] %v306
                %v308 = vld [vmem:[%s198 + $0x360] sm:%s191]
                %309 = vst [vmem:[%s199 + $0xd8] sm:%s191] %v308
                %v310 = vld [vmem:[%s198 + $0x370] sm:%s191]
                %311 = vst [vmem:[%s199 + $0xdc] sm:%s191] %v310
                %v312 = vld [vmem:[%s198 + $0x380] sm:%s191]
                %313 = vst [vmem:[%s199 + $0xe0] sm:%s191] %v312
                %v314 = vld [vmem:[%s198 + $0x390] sm:%s191]
                %315 = vst [vmem:[%s199 + $0xe4] sm:%s191] %v314
                %v316 = vld [vmem:[%s198 + $0x3a0] sm:%s191]
                %317 = vst [vmem:[%s199 + $0xe8] sm:%s191] %v316
                %v318 = vld [vmem:[%s198 + $0x3b0] sm:%s191]
                %319 = vst [vmem:[%s199 + $0xec] sm:%s191] %v318
                %v320 = vld [vmem:[%s198 + $0x3c0] sm:%s191]
                %321 = vst [vmem:[%s199 + $0xf0] sm:%s191] %v320
                %v322 = vld [vmem:[%s198 + $0x3d0] sm:%s191]
                %323 = vst [vmem:[%s199 + $0xf4] sm:%s191] %v322
                %v324 = vld [vmem:[%s198 + $0x3e0] sm:%s191]
                %325 = vst [vmem:[%s199 + $0xf8] sm:%s191] %v324
                %v326 = vld [vmem:[%s198 + $0x3f0] sm:%s191]
                %327 = vst [vmem:[%s199 + $0xfc] sm:%s191] %v326
              $region41: #{time_embed_forward.3} parent=35 // loop_footer
                %s197 = sadd.s32 1, %s193
              $region42: #{time_embed_forward.3} parent=35 // loop_footer_branch
                %192 = sbr.rel target = $region38
              $region43: #{time_embed_forward.3} parent=35 // loop_exit
                _
            $region36: #{time_embed_forward.3} parent=27 // pred_fallthru
              _
          $region28: #{time_embed_forward.3} parent=23 // pred_fallthru
            _
          %476 = vnop
        $region24: #{time_embed_forward.3} parent=19 // pred_fallthru
          _
        // Predicated region
        $region62: #{time_embed_forward.3} parent=19 // pred_check
          %p477 = pneg %p104
        $region63: #{time_embed_forward.3} parent=19 // pred_check_branch
          %479 = sbr.rel (%p477) target = $region65
        $region64: #{time_embed_forward.3} parent=19 // pred_region
          %p480 = scmp.lt.s32.totalorder %s17, 3
          %s481 = scalar_select %p480, %s17, 3
          %s482 = scalar_lea.vmem %s2, %s481
        $region65: #{time_embed_forward.3} parent=19 // pred_fallthru
          _
      $region20: #{time_embed_forward.3} parent=5 // pred_fallthru
        _
      %p483 = scmp.le.s32.totalorder 1, %s9
      %p484 = scmp.lt.s32.totalorder %s9, 5
      %p485 = pnand %p483, %p484
      %p486 = pneg %p485
      // Predicated region
      $region66: #{time_embed_forward.3} parent=5 // pred_check
        _
      $region67: #{time_embed_forward.3} parent=5 // pred_check_branch
        %488 = sbr.rel (%p485) target = $region69
      $region68: #{time_embed_forward.3} parent=5 // pred_region
        %s489 = ssub.s32 %s9, 1
        %s490 = sand.u32 %s71, 1
        %s491 = sand.u32 %s71, 1
        %s492 = smul.addr %s491, 256
        %s493 = scalar_lea.vmem [#allocation3], %s492
        // Predicated region
        $region70: #{time_embed_forward.3} parent=68 // pred_check
          %p494 = pneg %p84
        $region71: #{time_embed_forward.3} parent=68 // pred_check_branch
          %496 = sbr.rel (%p494) target = $region73
        $region72: #{time_embed_forward.3} parent=68 // pred_region
          _
        $region73: #{time_embed_forward.3} parent=68 // pred_fallthru
          _
        %s497 = smul.u32 2, %s19
        %s498 = smul.u32 4, %s21
        %p499 = scmp.lt.s32.totalorder %s497, 1
        %s500 = scalar_select %p499, %s497, 1
        %p501 = scmp.lt.s32.totalorder %s498, 3
        %s502 = scalar_select %p501, %s498, 3
        %s503 = smul.addr %s500, 4
        %s504 = sadd.s32 %s502, %s503
        %s505 = smul.addr %s504, 4
        %s506 = scalar_lea.vmem %s0, %s505
        %p507 = pneg %p56
        %p508 = pneg %p53
        %s509 = sand.u32 %s71, 1
        %s510 = sand.u32 %s71, 1
        %s511 = smul.addr %s510, 256
        %s512 = scalar_lea.vmem [#allocation3], %s511
        %p513 = pneg %p84
        %p514 = pneg %p81
        %p515 = scmp.lt.s32.totalorder %s20, 3
        %s516 = scalar_select %p515, %s20, 3
        %s517 = scalar_lea.vmem %s2, %s516
        %p518 = pneg %p110
        %p519 = pneg %p107
        %p520 = pneg %p138
        %p521 = pneg %p135
        %s522 = sand.u32 %s125, 1
        %s523 = sand.u32 %s125, 1
        %s524 = smul.addr %s523, 8
        %s525 = scalar_lea.vmem [#allocation4], %s524
        %s526 = smul.u32 2, %s19
        %s527 = smul.u32 4, %s21
        %p528 = scmp.lt.s32.totalorder %s526, 1
        %s529 = scalar_select %p528, %s526, 1
        %p530 = scmp.lt.s32.totalorder %s527, 3
        %s531 = scalar_select %p530, %s527, 3
        %s532 = smul.addr %s529, 4
        %s533 = sadd.s32 %s531, %s532
        %s534 = smul.addr %s533, 4
        %s535 = scalar_lea.vmem %s0, %s534
        %s536 = smul.u32 2, %s19
        %s537 = smul.u32 4, %s21
        %s538 = smul.u32 64, %s21
        %p539 = scmp.lt.s32.totalorder %s20, 3
        %s540 = scalar_select %p539, %s20, 3
        %s541 = scalar_lea.vmem %s2, %s540
        %s542 = smul.u32 2, %s19
        %p543 = scmp.eq.s32.totalorder %s21, 0
        // Predicated region
        $region74: #{time_embed_forward.3} parent=68 // pred_check
          %p544 = pneg %p543
        $region75: #{time_embed_forward.3} parent=68 // pred_check_branch
          %546 = sbr.rel (%p544) target = $region77
        $region76: #{time_embed_forward.3} parent=68 // pred_region
          %547 = vst [vmem:[#allocation2] sm:$0xff] 0.0
          %548 = vst [vmem:[#allocation2 + $0x8] sm:$0xff] 0.0
        $region77: #{time_embed_forward.3} parent=68 // pred_fallthru
          _
        %v549 = vld [vmem:[#allocation2] sm:$0xff]
        %v550 = vld [vmem:[#allocation2 + $0x8] sm:$0xff]
        %v551 = vld [vmem:[%s535] sm:$0xff]
        %v552 = vld [vmem:[%s535 + $0x8] sm:$0xff]
        %v553 = vld [vmem:[%s535 + $0x10] sm:$0xff]
        %v554 = vld [vmem:[%s535 + $0x18] sm:$0xff]
        %v555 = vld [vmem:[%s493] sm:$0xf]
        %v556 = vld [vmem:[%s493 + $0x4] sm:$0xf]
        %v557 = vld [vmem:[%s493 + $0x8] sm:$0xf]
        %v558 = vld [vmem:[%s493 + $0xc] sm:$0xf]
        %v559 = vld [vmem:[%s493 + $0x10] sm:$0xf]
        %v560 = vld [vmem:[%s493 + $0x14] sm:$0xf]
        %v561 = vld [vmem:[%s493 + $0x18] sm:$0xf]
        %v562 = vld [vmem:[%s493 + $0x1c] sm:$0xf]
        %v563 = vld [vmem:[%s493 + $0x20] sm:$0xf]
        %v564 = vld [vmem:[%s493 + $0x24] sm:$0xf]
        %v565 = vld [vmem:[%s493 + $0x28] sm:$0xf]
        %v566 = vld [vmem:[%s493 + $0x2c] sm:$0xf]
        %v567 = vld [vmem:[%s493 + $0x30] sm:$0xf]
        %v568 = vld [vmem:[%s493 + $0x34] sm:$0xf]
        %v569 = vld [vmem:[%s493 + $0x38] sm:$0xf]
        %v570 = vld [vmem:[%s493 + $0x3c] sm:$0xf]
        %v571 = vld [vmem:[%s493 + $0x40] sm:$0xf]
        %v572 = vld [vmem:[%s493 + $0x44] sm:$0xf]
        %v573 = vld [vmem:[%s493 + $0x48] sm:$0xf]
        %v574 = vld [vmem:[%s493 + $0x4c] sm:$0xf]
        %v575 = vld [vmem:[%s493 + $0x50] sm:$0xf]
        %v576 = vld [vmem:[%s493 + $0x54] sm:$0xf]
        %v577 = vld [vmem:[%s493 + $0x58] sm:$0xf]
        %v578 = vld [vmem:[%s493 + $0x5c] sm:$0xf]
        %v579 = vld [vmem:[%s493 + $0x60] sm:$0xf]
        %v580 = vld [vmem:[%s493 + $0x64] sm:$0xf]
        %v581 = vld [vmem:[%s493 + $0x68] sm:$0xf]
        %v582 = vld [vmem:[%s493 + $0x6c] sm:$0xf]
        %v583 = vld [vmem:[%s493 + $0x70] sm:$0xf]
        %v584 = vld [vmem:[%s493 + $0x74] sm:$0xf]
        %v585 = vld [vmem:[%s493 + $0x78] sm:$0xf]
        %v586 = vld [vmem:[%s493 + $0x7c] sm:$0xf]
        %v587 = vld [vmem:[%s493 + $0x80] sm:$0xf]
        %v588 = vld [vmem:[%s493 + $0x84] sm:$0xf]
        %v589 = vld [vmem:[%s493 + $0x88] sm:$0xf]
        %v590 = vld [vmem:[%s493 + $0x8c] sm:$0xf]
        %v591 = vld [vmem:[%s493 + $0x90] sm:$0xf]
        %v592 = vld [vmem:[%s493 + $0x94] sm:$0xf]
        %v593 = vld [vmem:[%s493 + $0x98] sm:$0xf]
        %v594 = vld [vmem:[%s493 + $0x9c] sm:$0xf]
        %v595 = vld [vmem:[%s493 + $0xa0] sm:$0xf]
        %v596 = vld [vmem:[%s493 + $0xa4] sm:$0xf]
        %v597 = vld [vmem:[%s493 + $0xa8] sm:$0xf]
        %v598 = vld [vmem:[%s493 + $0xac] sm:$0xf]
        %v599 = vld [vmem:[%s493 + $0xb0] sm:$0xf]
        %v600 = vld [vmem:[%s493 + $0xb4] sm:$0xf]
        %v601 = vld [vmem:[%s493 + $0xb8] sm:$0xf]
        %v602 = vld [vmem:[%s493 + $0xbc] sm:$0xf]
        %v603 = vld [vmem:[%s493 + $0xc0] sm:$0xf]
        %v604 = vld [vmem:[%s493 + $0xc4] sm:$0xf]
        %v605 = vld [vmem:[%s493 + $0xc8] sm:$0xf]
        %v606 = vld [vmem:[%s493 + $0xcc] sm:$0xf]
        %v607 = vld [vmem:[%s493 + $0xd0] sm:$0xf]
        %v608 = vld [vmem:[%s493 + $0xd4] sm:$0xf]
        %v609 = vld [vmem:[%s493 + $0xd8] sm:$0xf]
        %v610 = vld [vmem:[%s493 + $0xdc] sm:$0xf]
        %v611 = vld [vmem:[%s493 + $0xe0] sm:$0xf]
        %v612 = vld [vmem:[%s493 + $0xe4] sm:$0xf]
        %v613 = vld [vmem:[%s493 + $0xe8] sm:$0xf]
        %v614 = vld [vmem:[%s493 + $0xec] sm:$0xf]
        %v615 = vld [vmem:[%s493 + $0xf0] sm:$0xf]
        %v616 = vld [vmem:[%s493 + $0xf4] sm:$0xf]
        %v617 = vld [vmem:[%s493 + $0xf8] sm:$0xf]
        %v618 = vld [vmem:[%s493 + $0xfc] sm:$0xf]
        %v623 = vunpack.c.l.b16 %v551
        %v624 = vunpack.c.h.b16 %v551
        %v625 = vunpack.c.l.b16 %v552
        %v626 = vunpack.c.h.b16 %v552
        %v627 = vunpack.c.l.b16 %v553
        %v628 = vunpack.c.h.b16 %v553
        %v629 = vunpack.c.l.b16 %v554
        %v630 = vunpack.c.h.b16 %v554
        %v631 = vpack.c.b16 %v627, %v623
        %v632 = vpack.c.b16 %v628, %v624
        %v633 = vpack.c.b16 %v629, %v625
        %v634 = vpack.c.b16 %v630, %v626
        %v703 = vunpack.c.l.b16 %v555
        %v704 = vunpack.c.l.b16 %v556
        %v705 = vunpack.c.l.b16 %v557
        %v706 = vunpack.c.l.b16 %v558
        %v707 = vunpack.c.l.b16 %v559
        %v708 = vunpack.c.l.b16 %v560
        %v709 = vunpack.c.l.b16 %v561
        %v710 = vunpack.c.l.b16 %v562
        %v711 = vunpack.c.l.b16 %v563
        %v712 = vunpack.c.l.b16 %v564
        %v713 = vunpack.c.l.b16 %v565
        %v714 = vunpack.c.l.b16 %v566
        %v715 = vunpack.c.l.b16 %v567
        %v716 = vunpack.c.l.b16 %v568
        %v717 = vunpack.c.l.b16 %v569
        %v718 = vunpack.c.l.b16 %v570
        %v719 = vunpack.c.l.b16 %v571
        %v720 = vunpack.c.l.b16 %v572
        %v721 = vunpack.c.l.b16 %v573
        %v722 = vunpack.c.l.b16 %v574
        %v723 = vunpack.c.l.b16 %v575
        %v724 = vunpack.c.l.b16 %v576
        %v725 = vunpack.c.l.b16 %v577
        %v726 = vunpack.c.l.b16 %v578
        %v727 = vunpack.c.l.b16 %v579
        %v728 = vunpack.c.l.b16 %v580
        %v729 = vunpack.c.l.b16 %v581
        %v730 = vunpack.c.l.b16 %v582
        %v731 = vunpack.c.l.b16 %v583
        %v732 = vunpack.c.l.b16 %v584
        %v733 = vunpack.c.l.b16 %v585
        %v734 = vunpack.c.l.b16 %v586
        %v735 = vunpack.c.l.b16 %v587
        %v736 = vunpack.c.l.b16 %v588
        %v737 = vunpack.c.l.b16 %v589
        %v738 = vunpack.c.l.b16 %v590
        %v739 = vunpack.c.l.b16 %v591
        %v740 = vunpack.c.l.b16 %v592
        %v741 = vunpack.c.l.b16 %v593
        %v742 = vunpack.c.l.b16 %v594
        %v743 = vunpack.c.l.b16 %v595
        %v744 = vunpack.c.l.b16 %v596
        %v745 = vunpack.c.l.b16 %v597
        %v746 = vunpack.c.l.b16 %v598
        %v747 = vunpack.c.l.b16 %v599
        %v748 = vunpack.c.l.b16 %v600
        %v749 = vunpack.c.l.b16 %v601
        %v750 = vunpack.c.l.b16 %v602
        %v751 = vunpack.c.l.b16 %v603
        %v752 = vunpack.c.l.b16 %v604
        %v753 = vunpack.c.l.b16 %v605
        %v754 = vunpack.c.l.b16 %v606
        %v755 = vunpack.c.l.b16 %v607
        %v756 = vunpack.c.l.b16 %v608
        %v757 = vunpack.c.l.b16 %v609
        %v758 = vunpack.c.l.b16 %v610
        %v759 = vunpack.c.l.b16 %v611
        %v760 = vunpack.c.l.b16 %v612
        %v761 = vunpack.c.l.b16 %v613
        %v762 = vunpack.c.l.b16 %v614
        %v763 = vunpack.c.l.b16 %v615
        %v764 = vunpack.c.l.b16 %v616
        %v765 = vunpack.c.l.b16 %v617
        %v766 = vunpack.c.l.b16 %v618
        %v767 = vpack.c.b16 %v704, %v703
        %v768 = vpack.c.b16 %v706, %v705
        %v769 = vpack.c.b16 %v708, %v707
        %v770 = vpack.c.b16 %v710, %v709
        %v771 = vpack.c.b16 %v712, %v711
        %v772 = vpack.c.b16 %v714, %v713
        %v773 = vpack.c.b16 %v716, %v715
        %v774 = vpack.c.b16 %v718, %v717
        %v775 = vpack.c.b16 %v720, %v719
        %v776 = vpack.c.b16 %v722, %v721
        %v777 = vpack.c.b16 %v724, %v723
        %v778 = vpack.c.b16 %v726, %v725
        %v779 = vpack.c.b16 %v728, %v727
        %v780 = vpack.c.b16 %v730, %v729
        %v781 = vpack.c.b16 %v732, %v731
        %v782 = vpack.c.b16 %v734, %v733
        %v783 = vpack.c.b16 %v736, %v735
        %v784 = vpack.c.b16 %v738, %v737
        %v785 = vpack.c.b16 %v740, %v739
        %v786 = vpack.c.b16 %v742, %v741
        %v787 = vpack.c.b16 %v744, %v743
        %v788 = vpack.c.b16 %v746, %v745
        %v789 = vpack.c.b16 %v748, %v747
        %v790 = vpack.c.b16 %v750, %v749
        %v791 = vpack.c.b16 %v752, %v751
        %v792 = vpack.c.b16 %v754, %v753
        %v793 = vpack.c.b16 %v756, %v755
        %v794 = vpack.c.b16 %v758, %v757
        %v795 = vpack.c.b16 %v760, %v759
        %v796 = vpack.c.b16 %v762, %v761
        %v797 = vpack.c.b16 %v764, %v763
        %v798 = vpack.c.b16 %v766, %v765
        %831 = vmatpush.bf16.msra.mxu0 %v774
        %832 = vmatpush.bf16.msra.mxu0 %v773
        %833 = vmatpush.bf16.msra.mxu0 %v772
        %834 = vmatpush.bf16.msra.mxu0 %v771
        %835 = vmatpush.bf16.msra.mxu0 %v770
        %836 = vmatpush.bf16.msra.mxu0 %v769
        %837 = vmatpush.bf16.msra.mxu0 %v768
        %838 = vmatpush.bf16.msra.mxu0 %v767
        %839 = vmatmul.bf16.gmra.mxu0 %v631
        %v840 = vpop.f32.mrf.mxu0
        %v841 = vadd.f32 0.0, %v840
        %v842 = vpop.f32.mrf.mxu0
        %v843 = vadd.f32 0.0, %v842
        %844 = vdwg.mxu0
        %845 = vmatpush.bf16.msra.mxu0 %v782
        %846 = vmatpush.bf16.msra.mxu0 %v781
        %847 = vmatpush.bf16.msra.mxu0 %v780
        %848 = vmatpush.bf16.msra.mxu0 %v779
        %849 = vmatpush.bf16.msra.mxu0 %v778
        %850 = vmatpush.bf16.msra.mxu0 %v777
        %851 = vmatpush.bf16.msra.mxu0 %v776
        %852 = vmatpush.bf16.msra.mxu0 %v775
        %853 = vmatmul.bf16.gmra.mxu0 %v632
        %v854 = vpop.f32.mrf.mxu0
        %v855 = vadd.f32 %v841, %v854
        %v856 = vpop.f32.mrf.mxu0
        %v857 = vadd.f32 %v843, %v856
        %858 = vdwg.mxu0
        %859 = vmatpush.bf16.msra.mxu0 %v790
        %860 = vmatpush.bf16.msra.mxu0 %v789
        %861 = vmatpush.bf16.msra.mxu0 %v788
        %862 = vmatpush.bf16.msra.mxu0 %v787
        %863 = vmatpush.bf16.msra.mxu0 %v786
        %864 = vmatpush.bf16.msra.mxu0 %v785
        %865 = vmatpush.bf16.msra.mxu0 %v784
        %866 = vmatpush.bf16.msra.mxu0 %v783
        %867 = vmatmul.bf16.gmra.mxu0 %v633
        %v868 = vpop.f32.mrf.mxu0
        %v869 = vadd.f32 %v855, %v868
        %v870 = vpop.f32.mrf.mxu0
        %v871 = vadd.f32 %v857, %v870
        %872 = vdwg.mxu0
        %873 = vmatpush.bf16.msra.mxu0 %v798
        %874 = vmatpush.bf16.msra.mxu0 %v797
        %875 = vmatpush.bf16.msra.mxu0 %v796
        %876 = vmatpush.bf16.msra.mxu0 %v795
        %877 = vmatpush.bf16.msra.mxu0 %v794
        %878 = vmatpush.bf16.msra.mxu0 %v793
        %879 = vmatpush.bf16.msra.mxu0 %v792
        %880 = vmatpush.bf16.msra.mxu0 %v791
        %881 = vmatmul.bf16.gmra.mxu0 %v634
        %v882 = vpop.f32.mrf.mxu0
        %v883 = vadd.f32 %v869, %v882
        %v884 = vpop.f32.mrf.mxu0
        %v885 = vadd.f32 %v871, %v884
        %886 = vdwg.mxu0
        %v887 = vadd.f32 %v549, %v883
        %v888 = vadd.f32 %v550, %v885
        %889 = vst [vmem:[#allocation2] sm:$0xff] %v887
        %890 = vst [vmem:[#allocation2 + $0x8] sm:$0xff] %v888
        // Predicated region
        $region78: #{time_embed_forward.3} parent=68 // pred_check
          %p891 = pneg %p543
        $region79: #{time_embed_forward.3} parent=68 // pred_check_branch
          %893 = sbr.rel (%p891) target = $region81
        $region80: #{time_embed_forward.3} parent=68 // pred_region
          %v894 = vld [vmem:[#allocation2] sm:$0xff]
          %v895 = vld [vmem:[#allocation2 + $0x8] sm:$0xff]
          %v896 = vld [vmem:[%s541] sm:$0x1]
          %v898 = vperm.slane %v896, 0
          %v900 = vadd.f32 %v894, %v898
          %v901 = vadd.f32 %v895, %v898
          %v902 = vsub.f32 0.0, %v900
          %v903 = vsub.f32 0.0, %v901
          %v904 = vmul.f32 %v902, 1.442695
          %v905 = vpow.pop %v904
          %v906 = vmul.f32 %v903, 1.442695
          %v907 = vpow.pop %v906
          %v908 = vadd.f32 %v905, 1.0
          %v909 = vadd.f32 %v907, 1.0
          %v910 = vrcp.pop %v908
          %v911 = vrcp.pop %v909
          %v912 = vmul.f32 %v900, %v910
          %v913 = vmul.f32 %v901, %v911
          %v914 = vpack.c.bf16 %v912, %v912
          %v915 = vpack.c.bf16 %v913, %v913
          %916 = vst [vmem:[%s525] sm:$0xf] %v914
          %917 = vst [vmem:[%s525 + $0x4] sm:$0xf] %v915
        $region81: #{time_embed_forward.3} parent=68 // pred_fallthru
          _
        %s918 = sand.u32 %s125, 1
        %s919 = sand.u32 %s125, 1
        %s920 = smul.addr %s919, 8
        %s921 = scalar_lea.vmem [#allocation4], %s920
        // Predicated region
        $region82: #{time_embed_forward.3} parent=68 // pred_check
          %p922 = pneg %p135
        $region83: #{time_embed_forward.3} parent=68 // pred_check_branch
          %924 = sbr.rel (%p922) target = $region85
        $region84: #{time_embed_forward.3} parent=68 // pred_region
          %s925 = smul.u32 2, %s19
          %s926 = smul.addr %s925, 4
          %s927 = sadd.s32 %s20, %s926
          %s928 = smul.addr %s927, 4
          %s929 = scalar_lea.vmem %s3, %s928
          // Predicated region
          $region86: #{time_embed_forward.3} parent=84 // pred_check
            _
          $region87: #{time_embed_forward.3} parent=84 // pred_check_branch
            %931 = sbr.rel (0) target = $region89
          $region88: #{time_embed_forward.3} parent=84 // pred_region
            // Predicated region
            $region90: #{time_embed_forward.3} parent=88 // pred_check
              _
            $region91: #{time_embed_forward.3} parent=88 // pred_check_branch
              %933 = sbr.rel target = $region93
            $region92: #{time_embed_forward.3} parent=88 // pred_region
              // Predicated region
              $region105: #{time_embed_forward.3} parent=92 // pred_check
                _
              $region106: #{time_embed_forward.3} parent=92 // pred_check_branch
                %951 = sbr.rel (0) target = $region108
              $region107: #{time_embed_forward.3} parent=92 // pred_region
                loop: start=0, step=1, limit=1
                $region109: #{time_embed_forward.3} parent=107 // loop_pre_header
                  _
                $region110: #{time_embed_forward.3} parent=107 // loop_header
                  %s953 = sphi 0, %s957
                  %p954 = scmp.ge.s32.totalorder %s953, 1
                  %s958 = sphi %s921, %s921
                  %s959 = sphi %s929, %s929
                $region111: #{time_embed_forward.3} parent=107 // loop_header_branch
                  %956 = sbr.rel (%p954) target = $region115
                $region112: #{time_embed_forward.3} parent=107 // loop_body
                  _
                $region113: #{time_embed_forward.3} parent=107 // loop_footer
                  %s957 = sadd.s32 1, %s953
                $region114: #{time_embed_forward.3} parent=107 // loop_footer_branch
                  %952 = sbr.rel target = $region110
                $region115: #{time_embed_forward.3} parent=107 // loop_exit
                  _
                %s961 = ssub.s32 16, 1
                loop: start=0, step=1, limit=1
                $region116: #{time_embed_forward.3} parent=107 // loop_pre_header
                  _
                $region117: #{time_embed_forward.3} parent=107 // loop_header
                  %s963 = sphi 0, %s967
                  %p964 = scmp.ge.s32.totalorder %s963, 1
                  %s968 = sphi %s921, %s921
                  %s969 = sphi %s929, %s929
                $region118: #{time_embed_forward.3} parent=107 // loop_header_branch
                  %966 = sbr.rel (%p964) target = $region122
                $region119: #{time_embed_forward.3} parent=107 // loop_body
                  %v970 = vld [vmem:[%s968] sm:%s961]
                  %971 = vst [vmem:[%s969] sm:%s961] %v970
                  %v972 = vld [vmem:[%s968 + $0x4] sm:%s961]
                  %973 = vst [vmem:[%s969 + $0x10] sm:%s961] %v972
                $region120: #{time_embed_forward.3} parent=107 // loop_footer
                  %s967 = sadd.s32 1, %s963
                $region121: #{time_embed_forward.3} parent=107 // loop_footer_branch
                  %962 = sbr.rel target = $region117
                $region122: #{time_embed_forward.3} parent=107 // loop_exit
                  _
              $region108: #{time_embed_forward.3} parent=92 // pred_fallthru
                _
            $region93: #{time_embed_forward.3} parent=88 // pred_fallthru
              _
            // Predicated region
            $region94: #{time_embed_forward.3} parent=88 // pred_check
              _
            $region95: #{time_embed_forward.3} parent=88 // pred_check_branch
              %935 = sbr.rel (0) target = $region97
            $region96: #{time_embed_forward.3} parent=88 // pred_region
              %s937 = ssub.s32 16, 1
              loop: start=0, step=1, limit=1
              $region98: #{time_embed_forward.3} parent=96 // loop_pre_header
                _
              $region99: #{time_embed_forward.3} parent=96 // loop_header
                %s939 = sphi 0, %s943
                %p940 = scmp.ge.s32.totalorder %s939, 1
                %s944 = sphi %s921, %s921
                %s945 = sphi %s929, %s929
              $region100: #{time_embed_forward.3} parent=96 // loop_header_branch
                %942 = sbr.rel (%p940) target = $region104
              $region101: #{time_embed_forward.3} parent=96 // loop_body
                %v946 = vld [vmem:[%s944] sm:%s937]
                %947 = vst [vmem:[%s945] sm:%s937] %v946
                %v948 = vld [vmem:[%s944 + $0x4] sm:%s937]
                %949 = vst [vmem:[%s945 + $0x10] sm:%s937] %v948
              $region102: #{time_embed_forward.3} parent=96 // loop_footer
                %s943 = sadd.s32 1, %s939
              $region103: #{time_embed_forward.3} parent=96 // loop_footer_branch
                %938 = sbr.rel target = $region99
              $region104: #{time_embed_forward.3} parent=96 // loop_exit
                _
            $region97: #{time_embed_forward.3} parent=88 // pred_fallthru
              _
          $region89: #{time_embed_forward.3} parent=84 // pred_fallthru
            _
          %974 = vnop
        $region85: #{time_embed_forward.3} parent=68 // pred_fallthru
          _
      $region69: #{time_embed_forward.3} parent=5 // pred_fallthru
        _
      %p975 = scmp.le.s32.totalorder 2, %s9
      // Predicated region
      $region123: #{time_embed_forward.3} parent=5 // pred_check
        %p976 = pneg %p975
      $region124: #{time_embed_forward.3} parent=5 // pred_check_branch
        %978 = sbr.rel (%p976) target = $region126
      $region125: #{time_embed_forward.3} parent=5 // pred_region
        %s979 = ssub.s32 %s9, 2
        // Predicated region
        $region127: #{time_embed_forward.3} parent=125 // pred_check
          %p980 = pneg %p141
        $region128: #{time_embed_forward.3} parent=125 // pred_check_branch
          %982 = sbr.rel (%p980) target = $region130
        $region129: #{time_embed_forward.3} parent=125 // pred_region
          %s983 = sand.u32 %s126, 1
          %s984 = sand.u32 %s126, 1
          %s985 = smul.addr %s984, 8
          %s986 = scalar_lea.vmem [#allocation4], %s985
        $region130: #{time_embed_forward.3} parent=125 // pred_fallthru
          _
      $region126: #{time_embed_forward.3} parent=5 // pred_fallthru
        _
    $region6: #{time_embed_forward.3} parent=1 // loop_footer
      %s13 = sadd.s32 1, %s9
    $region7: #{time_embed_forward.3} parent=1 // loop_footer_branch
      %8 = sbr.rel target = $region3
    $region8: #{time_embed_forward.3} parent=1 // loop_exit
      _

</llo_original>
